<compile_context>
chip_gen: v7x
topology: tpu7x:2x2x1
jax: 0.10.0
libtpu: 0.0.40
codegen_flags: <defaults>
</compile_context>

<pallas_src>
import functools
import math

import jax
import jax.numpy as jnp
from jax.experimental import pallas as pl
from jax.experimental.pallas import tpu as pltpu


# --------------------------------------------------------------------------- kernels
def _layernorm_kernel(x_ref, g_ref, b_ref, o_ref, *, eps):
    """LayerNorm over the last axis for one batch element.  x block: [1, S, H]."""
    x = x_ref[0].astype(jnp.float32)                    # [S, H]
    mu = jnp.mean(x, axis=-1, keepdims=True)
    var = jnp.mean(jnp.square(x - mu), axis=-1, keepdims=True)
    y = (x - mu) * jax.lax.rsqrt(var + eps) * g_ref[...] + b_ref[...]
    o_ref[0] = y.astype(o_ref.dtype)


def layernorm(x, gamma, beta, eps=1e-12):
    """x: [B, S, H]; gamma/beta: [1, H]."""
    B, S, H = x.shape
    return pl.pallas_call(
        functools.partial(_layernorm_kernel, eps=eps),
        grid=(B,),
        in_specs=[pl.BlockSpec((1, S, H), lambda b: (b, 0, 0)),
                  pl.BlockSpec((1, H), lambda b: (0, 0)),
                  pl.BlockSpec((1, H), lambda b: (0, 0))],
        out_specs=pl.BlockSpec((1, S, H), lambda b: (b, 0, 0)),
        out_shape=jax.ShapeDtypeStruct((B, S, H), jnp.float32),
        compiler_params=pltpu.CompilerParams(dimension_semantics=("parallel",)),
    )(x, gamma, beta)


def _transformer_block_kernel(x_ref, mask_ref,
                              wqkv_ref, bqkv_ref, wo_ref, bo_ref,
                              ln1_g_ref, ln1_b_ref,
                              w1_ref, b1_ref, w2_ref, b2_ref,
                              ln2_g_ref, ln2_b_ref,
                              o_ref, *, n_heads, head_dim, eps):
    """One full DistilBERT block for one batch element, all intermediates in VMEM."""
    H = n_heads * head_dim
    x = x_ref[0].astype(jnp.float32)                    # [S, H]
    mask = mask_ref[0]                                  # [1, S]  (1.0 keep / 0.0 mask)

    def ln(y, g_ref, b_ref):
        mu = jnp.mean(y, axis=-1, keepdims=True)
        var = jnp.mean(jnp.square(y - mu), axis=-1, keepdims=True)
        return (y - mu) * jax.lax.rsqrt(var + eps) * g_ref[...] + b_ref[...]

    # ---- fused QKV projection: one [H, 3H] bf16 matmul, f32 accumulate ----
    qkv = jnp.dot(x.astype(jnp.bfloat16), wqkv_ref[...],
                  preferred_element_type=jnp.float32) + bqkv_ref[...]
    q = qkv[:, 0 * H:1 * H]
    k = qkv[:, 1 * H:2 * H]
    v = qkv[:, 2 * H:3 * H]

    # ---- multi-head attention, heads split in-kernel (static unrolled loop) ----
    scale = 1.0 / math.sqrt(head_dim)
    ctx_heads = []
    for h in range(n_heads):
        lo, hi = h * head_dim, (h + 1) * head_dim
        qh, kh, vh = q[:, lo:hi], k[:, lo:hi], v[:, lo:hi]
        s = jnp.dot(qh, kh.T, preferred_element_type=jnp.float32) * scale   # [S, S]
        s = jnp.where(mask > 0.0, s, -1e30)              # mask keys (f32 scores)
        m = jnp.max(s, axis=-1, keepdims=True)
        p = jnp.exp(s - m)
        denom = jnp.sum(p, axis=-1, keepdims=True)
        p = p * pl.reciprocal(denom, approx=True)        # divide on the EUP slot
        ctx_heads.append(jnp.dot(p, vh, preferred_element_type=jnp.float32))
    ctx = jnp.concatenate(ctx_heads, axis=-1)            # [S, H]

    attn = jnp.dot(ctx.astype(jnp.bfloat16), wo_ref[...],
                   preferred_element_type=jnp.float32) + bo_ref[...]
    x1 = ln(x + attn, ln1_g_ref, ln1_b_ref)

    # ---- FFN ----
    h1 = jnp.dot(x1.astype(jnp.bfloat16), w1_ref[...],
                 preferred_element_type=jnp.float32) + b1_ref[...]
    # TODO(synk): DistilBERT uses exact erf GELU; tanh approximation is numerically close.
    h1 = jax.nn.gelu(h1, approximate=True)
    h2 = jnp.dot(h1.astype(jnp.bfloat16), w2_ref[...],
                 preferred_element_type=jnp.float32) + b2_ref[...]
    x2 = ln(x1 + h2, ln2_g_ref, ln2_b_ref)

    o_ref[0] = x2.astype(o_ref.dtype)


def transformer_block(x, mask3, layer, *, n_heads, head_dim, eps=1e-12):
    """x: [B, S, H]; mask3: [B, 1, S] -> [B, S, H]."""
    B, S, H = x.shape

    def full(a):
        return pl.BlockSpec(a.shape, lambda b: (0,) * a.ndim)

    in_specs = [
        pl.BlockSpec((1, S, H), lambda b: (b, 0, 0)),    # x
        pl.BlockSpec((1, 1, S), lambda b: (b, 0, 0)),    # attention mask
        full(layer["wqkv"]), full(layer["bqkv"]),
        full(layer["wo"]), full(layer["bo"]),
        full(layer["ln1_g"]), full(layer["ln1_b"]),
        full(layer["w1"]), full(layer["b1"]),
        full(layer["w2"]), full(layer["b2"]),
        full(layer["ln2_g"]), full(layer["ln2_b"]),
    ]
    return pl.pallas_call(
        functools.partial(_transformer_block_kernel,
                          n_heads=n_heads, head_dim=head_dim, eps=eps),
        grid=(B,),
        in_specs=in_specs,
        out_specs=pl.BlockSpec((1, S, H), lambda b: (b, 0, 0)),
        out_shape=jax.ShapeDtypeStruct((B, S, H), jnp.float32),
        compiler_params=pltpu.CompilerParams(dimension_semantics=("parallel",)),
    )(x, mask3,
      layer["wqkv"], layer["bqkv"], layer["wo"], layer["bo"],
      layer["ln1_g"], layer["ln1_b"],
      layer["w1"], layer["b1"], layer["w2"], layer["b2"],
      layer["ln2_g"], layer["ln2_b"])


def _head_kernel(cls_ref, pre_w_ref, pre_b_ref, cls_w_ref, cls_b_ref,
                 fc1_w_ref, fc1_b_ref, pred_w_ref, pred_b_ref, o_ref):
    """Fused DistilBERT classification head + BertRegressor head.

    All weights are zero-padded to 128 columns/rows -> every matmul and the final
    store are lane-dense; the wrapper slices the real [B, 2] output.
    """
    x = cls_ref[...].astype(jnp.float32)                 # [B, H]

    def mm(a, w_ref, b_ref):
        return jnp.dot(a.astype(jnp.bfloat16), w_ref[...],
                       preferred_element_type=jnp.float32) + b_ref[...]

    pooled = jnp.maximum(mm(x, pre_w_ref, pre_b_ref), 0.0)      # pre_classifier + ReLU
    logits = mm(pooled, cls_w_ref, cls_b_ref)                   # classifier
    h = jnp.maximum(mm(logits, fc1_w_ref, fc1_b_ref), 0.0)      # fc1 + ReLU
    # TODO(synk): nn.Dropout(p=0.3) is eval-mode identity; a training-mode mask would
    # use pltpu.prng_seed / pltpu.prng_random_bits here.
    y = jax.nn.softplus(mm(h, pred_w_ref, pred_b_ref))          # predict + softplus
    o_ref[...] = y.astype(o_ref.dtype)


def regressor_head(cls, params):
    """cls: [B, H] -> [B, 2]."""
    B = cls.shape[0]
    P = params["pred_w"].shape[1]

    def full(a):
        return pl.BlockSpec(a.shape, lambda i: (0,) * a.ndim)

    out = pl.pallas_call(
        _head_kernel,
        grid=(1,),
        in_specs=[full(cls),
                  full(params["pre_w"]), full(params["pre_b"]),
                  full(params["cls_w"]), full(params["cls_b"]),
                  full(params["fc1_w"]), full(params["fc1_b"]),
                  full(params["pred_w"]), full(params["pred_b"])],
        out_specs=pl.BlockSpec((B, P), lambda i: (0, 0)),
        out_shape=jax.ShapeDtypeStruct((B, P), jnp.float32),
        compiler_params=pltpu.CompilerParams(dimension_semantics=("arbitrary",)),
    )(cls, params["pre_w"], params["pre_b"], params["cls_w"], params["cls_b"],
      params["fc1_w"], params["fc1_b"], params["pred_w"], params["pred_b"])
    return out[:, :2]                                    # slice away lane padding


# --------------------------------------------------------------------------- model
def _pad2(w, rows, cols):
    out = jnp.zeros((rows, cols), w.dtype)
    return out.at[:w.shape[0], :w.shape[1]].set(w)


def init_params(key, *, vocab=100, max_pos=32, hidden=32, n_heads=2, ffn=64,
                n_layers=2, num_labels=32, fc_dim=64, pad=128):
    cfg = dict(vocab=vocab, max_pos=max_pos, hidden=hidden, n_heads=n_heads,
               head_dim=hidden // n_heads, ffn=ffn, n_layers=n_layers,
               num_labels=num_labels, fc_dim=fc_dim, pad=pad)

    keys = iter(jax.random.split(key, 64))

    def nrm(shape, dtype=jnp.bfloat16, scale=0.02):
        return (scale * jax.random.normal(next(keys), shape)).astype(dtype)

    H = hidden
    params = {
        "word_emb": nrm((vocab, H), jnp.float32),
        "pos_emb": nrm((max_pos, H), jnp.float32),
        "emb_ln_g": jnp.ones((1, H), jnp.float32),
        "emb_ln_b": jnp.zeros((1, H), jnp.float32),
        "layers": [],
    }
    for _ in range(n_layers):
        params["layers"].append({
            # fused QKV weight [H, 3H] (bf16) + bias (f32)
            "wqkv": nrm((H, 3 * H)), "bqkv": jnp.zeros((1, 3 * H), jnp.float32),
            "wo": nrm((H, H)), "bo": jnp.zeros((1, H), jnp.float32),
            "ln1_g": jnp.ones((1, H), jnp.float32), "ln1_b": jnp.zeros((1, H), jnp.float32),
            "w1": nrm((H, ffn)), "b1": jnp.zeros((1, ffn), jnp.float32),
            "w2": nrm((ffn, H)), "b2": jnp.zeros((1, H), jnp.float32),
            "ln2_g": jnp.ones((1, H), jnp.float32), "ln2_b": jnp.zeros((1, H), jnp.float32),
        })

    # Head weights, zero-padded to `pad` lanes so the fused head kernel is lane-dense.
    pre_w = nrm((H, H))
    cls_w = nrm((H, num_labels))
    fc1_w = nrm((num_labels, fc_dim))
    pred_w = nrm((fc_dim, 2))
    params.update({
        "pre_w": _pad2(pre_w, H, pad), "pre_b": jnp.zeros((1, pad), jnp.float32),
        "cls_w": _pad2(cls_w, pad, pad), "cls_b": jnp.zeros((1, pad), jnp.float32),
        "fc1_w": _pad2(fc1_w, pad, pad), "fc1_b": jnp.zeros((1, pad), jnp.float32),
        "pred_w": _pad2(pred_w, pad, pad), "pred_b": jnp.zeros((1, pad), jnp.float32),
    })
    return params, cfg


def bert_regressor_forward(params, cfg, input_ids, attention_mask):
    B, S = input_ids.shape
    H, nh, dh = cfg["hidden"], cfg["n_heads"], cfg["head_dim"]

    # Embeddings (gather is JAX glue; LayerNorm is a Pallas kernel).
    x = params["word_emb"][input_ids] + params["pos_emb"][None, :S, :]
    x = layernorm(x, params["emb_ln_g"], params["emb_ln_b"])            # [B, S, H]

    mask3 = attention_mask.astype(jnp.float32).reshape(B, 1, S)

    for layer in params["layers"]:
        x = transformer_block(x, mask3, layer, n_heads=nh, head_dim=dh)

    # NOTE: the reference also computes `torch.stack(hidden_states).sum(0).sum(1)`,
    # which is never used by the returned output; it is dropped here (perf feedback)
    # to avoid materializing [B, (L+1)*S, H] in HBM.

    cls = x[:, 0, :]                                                    # [B, H] CLS token
    return regressor_head(cls, params)                                  # [B, 2] f32


# --------------------------------------------------------------------------- main
if __name__ == "__main__":
    key = jax.random.PRNGKey(0)
    params, cfg = init_params(key)

    B, S = 2, 8
    input_ids = jax.random.randint(jax.random.fold_in(key, 1), (B, S), 0, cfg["vocab"])
    attention_mask = jnp.ones((B, S), dtype=jnp.float32)

    fwd = jax.jit(lambda p, ids, m: bert_regressor_forward(p, cfg, ids, m))
    out = fwd(params, input_ids, attention_mask)
    jax.block_until_ready(out)

    assert out.shape == (B, 2) and out.dtype == jnp.float32
    assert bool(jnp.all(out >= 0.0))  # softplus output is non-negative
    print("KERNEL_OK")
</pallas_src>

<mosaic_0001>
module attributes {stable_mosaic.version = 11 : i64} {
  func.func @_layernorm_kernel(%arg0: i32, %arg1: memref<1x8x32xf32, #tpu.memory_space<vmem>>, %arg2: memref<1x32xf32, #tpu.memory_space<vmem>>, %arg3: memref<1x32xf32, #tpu.memory_space<vmem>>, %arg4: memref<1x8x32xf32, #tpu.memory_space<vmem>>) attributes {dimension_semantics = [#tpu.dimension_semantics<parallel>], iteration_bounds = array<i64: 2>, scalar_prefetch = 0 : i64, scratch_operands = 0 : i64, tpu.core_type = #tpu.core_type<tc>, window_params = [{transform_indices = @transform_0, window_bounds = array<i64: 1, 8, 32>}, {pipeline_mode = #tpu.pipeline_mode<synchronous>, transform_indices = @transform_1, window_bounds = array<i64: 1, 32>}, {pipeline_mode = #tpu.pipeline_mode<synchronous>, transform_indices = @transform_2, window_bounds = array<i64: 1, 32>}, {transform_indices = @transform_3, window_bounds = array<i64: 1, 8, 32>}]} {
    %c0 = arith.constant 0 : index
    %c0_0 = arith.constant 0 : index
    %c0_1 = arith.constant 0 : index
    %0 = vector.load %arg1[%c0, %c0_0, %c0_1] : memref<1x8x32xf32, #tpu.memory_space<vmem>>, vector<1x8x32xf32>
    %1 = vector.shape_cast %0 : vector<1x8x32xf32> to vector<8x32xf32>
    %cst = arith.constant dense<0.000000e+00> : vector<8xf32>
    %2 = vector.multi_reduction <add>, %1, %cst [1] : vector<8x32xf32> to vector<8xf32>
    %3 = vector.shape_cast %2 : vector<8xf32> to vector<8x1xf32>
    %cst_2 = arith.constant 3.200000e+01 : f32
    %4 = vector.broadcast %cst_2 : f32 to vector<8x1xf32>
    %5 = arith.divf %3, %4 : vector<8x1xf32>
    %6 = vector.broadcast %5 : vector<8x1xf32> to vector<8x32xf32>
    %7 = arith.subf %1, %6 : vector<8x32xf32>
    %8 = arith.mulf %7, %7 : vector<8x32xf32>
    %cst_3 = arith.constant dense<0.000000e+00> : vector<8xf32>
    %9 = vector.multi_reduction <add>, %8, %cst_3 [1] : vector<8x32xf32> to vector<8xf32>
    %10 = vector.shape_cast %9 : vector<8xf32> to vector<8x1xf32>
    %cst_4 = arith.constant 3.200000e+01 : f32
    %11 = vector.broadcast %cst_4 : f32 to vector<8x1xf32>
    %12 = arith.divf %10, %11 : vector<8x1xf32>
    %13 = vector.broadcast %5 : vector<8x1xf32> to vector<8x32xf32>
    %14 = arith.subf %1, %13 : vector<8x32xf32>
    %cst_5 = arith.constant 9.99999996E-13 : f32
    %15 = vector.broadcast %cst_5 : f32 to vector<8x1xf32>
    %16 = arith.addf %12, %15 : vector<8x1xf32>
    %17 = math.rsqrt %16 : vector<8x1xf32>
    %18 = vector.broadcast %17 : vector<8x1xf32> to vector<8x32xf32>
    %19 = arith.mulf %14, %18 : vector<8x32xf32>
    %c0_6 = arith.constant 0 : index
    %c0_7 = arith.constant 0 : index
    %20 = vector.load %arg2[%c0_6, %c0_7] : memref<1x32xf32, #tpu.memory_space<vmem>>, vector<1x32xf32>
    %21 = vector.broadcast %20 : vector<1x32xf32> to vector<8x32xf32>
    %22 = arith.mulf %19, %21 : vector<8x32xf32>
    %c0_8 = arith.constant 0 : index
    %c0_9 = arith.constant 0 : index
    %23 = vector.load %arg3[%c0_8, %c0_9] : memref<1x32xf32, #tpu.memory_space<vmem>>, vector<1x32xf32>
    %24 = vector.broadcast %23 : vector<1x32xf32> to vector<8x32xf32>
    %25 = arith.addf %22, %24 : vector<8x32xf32>
    %c0_10 = arith.constant 0 : index
    %c0_11 = arith.constant 0 : index
    %c0_12 = arith.constant 0 : index
    %26 = vector.load %arg4[%c0_10, %c0_11, %c0_12] : memref<1x8x32xf32, #tpu.memory_space<vmem>>, vector<1x8x32xf32>
    %27 = vector.shape_cast %26 : vector<1x8x32xf32> to vector<8x32xf32>
    %28 = vector.shape_cast %25 : vector<8x32xf32> to vector<1x8x32xf32>
    tpu.vector_store %arg4[%c0_10, %c0_11, %c0_12], %28 {strides = array<i32>} : memref<1x8x32xf32, #tpu.memory_space<vmem>>, vector<1x8x32xf32>,
    return
  }
  func.func @transform_0(%arg0: i32) -> (i32, i32, i32) {
    %c0_i32 = arith.constant 0 : i32
    %c0_i32_0 = arith.constant 0 : i32
    %c0_i32_1 = arith.constant 0 : i32
    return %arg0, %c0_i32, %c0_i32_0 : i32, i32, i32
  }
  func.func @transform_1(%arg0: i32) -> (i32, i32) {
    %c0_i32 = arith.constant 0 : i32
    %c0_i32_0 = arith.constant 0 : i32
    %c0_i32_1 = arith.constant 0 : i32
    return %c0_i32, %c0_i32_0 : i32, i32
  }
  func.func @transform_2(%arg0: i32) -> (i32, i32) {
    %c0_i32 = arith.constant 0 : i32
    %c0_i32_0 = arith.constant 0 : i32
    %c0_i32_1 = arith.constant 0 : i32
    return %c0_i32, %c0_i32_0 : i32, i32
  }
  func.func @transform_3(%arg0: i32) -> (i32, i32, i32) {
    %c0_i32 = arith.constant 0 : i32
    %c0_i32_0 = arith.constant 0 : i32
    %c0_i32_1 = arith.constant 0 : i32
    return %arg0, %c0_i32, %c0_i32_0 : i32, i32, i32
  }
}

module attributes {stable_mosaic.version = 11 : i64} {
  func.func @_transformer_block_kernel(%arg0: i32, %arg1: memref<1x8x32xf32, #tpu.memory_space<vmem>>, %arg2: memref<1x1x8xf32, #tpu.memory_space<vmem>>, %arg3: memref<32x96xbf16, #tpu.memory_space<vmem>>, %arg4: memref<1x96xf32, #tpu.memory_space<vmem>>, %arg5: memref<32x32xbf16, #tpu.memory_space<vmem>>, %arg6: memref<1x32xf32, #tpu.memory_space<vmem>>, %arg7: memref<1x32xf32, #tpu.memory_space<vmem>>, %arg8: memref<1x32xf32, #tpu.memory_space<vmem>>, %arg9: memref<32x64xbf16, #tpu.memory_space<vmem>>, %arg10: memref<1x64xf32, #tpu.memory_space<vmem>>, %arg11: memref<64x32xbf16, #tpu.memory_space<vmem>>, %arg12: memref<1x32xf32, #tpu.memory_space<vmem>>, %arg13: memref<1x32xf32, #tpu.memory_space<vmem>>, %arg14: memref<1x32xf32, #tpu.memory_space<vmem>>, %arg15: memref<1x8x32xf32, #tpu.memory_space<vmem>>) attributes {dimension_semantics = [#tpu.dimension_semantics<parallel>], iteration_bounds = array<i64: 2>, scalar_prefetch = 0 : i64, scratch_operands = 0 : i64, tpu.core_type = #tpu.core_type<tc>, window_params = [{transform_indices = @transform_0, window_bounds = array<i64: 1, 8, 32>}, {transform_indices = @transform_1, window_bounds = array<i64: 1, 1, 8>}, {pipeline_mode = #tpu.pipeline_mode<synchronous>, transform_indices = @transform_2, window_bounds = array<i64: 32, 96>}, {pipeline_mode = #tpu.pipeline_mode<synchronous>, transform_indices = @transform_3, window_bounds = array<i64: 1, 96>}, {pipeline_mode = #tpu.pipeline_mode<synchronous>, transform_indices = @transform_4, window_bounds = array<i64: 32, 32>}, {pipeline_mode = #tpu.pipeline_mode<synchronous>, transform_indices = @transform_5, window_bounds = array<i64: 1, 32>}, {pipeline_mode = #tpu.pipeline_mode<synchronous>, transform_indices = @transform_6, window_bounds = array<i64: 1, 32>}, {pipeline_mode = #tpu.pipeline_mode<synchronous>, transform_indices = @transform_7, window_bounds = array<i64: 1, 32>}, {pipeline_mode = #tpu.pipeline_mode<synchronous>, transform_indices = @transform_8, window_bounds = array<i64: 32, 64>}, {pipeline_mode = #tpu.pipeline_mode<synchronous>, transform_indices = @transform_9, window_bounds = array<i64: 1, 64>}, {pipeline_mode = #tpu.pipeline_mode<synchronous>, transform_indices = @transform_10, window_bounds = array<i64: 64, 32>}, {pipeline_mode = #tpu.pipeline_mode<synchronous>, transform_indices = @transform_11, window_bounds = array<i64: 1, 32>}, {pipeline_mode = #tpu.pipeline_mode<synchronous>, transform_indices = @transform_12, window_bounds = array<i64: 1, 32>}, {pipeline_mode = #tpu.pipeline_mode<synchronous>, transform_indices = @transform_13, window_bounds = array<i64: 1, 32>}, {transform_indices = @transform_14, window_bounds = array<i64: 1, 8, 32>}]} {
    %c0 = arith.constant 0 : index
    %c0_0 = arith.constant 0 : index
    %c0_1 = arith.constant 0 : index
    %0 = vector.load %arg1[%c0, %c0_0, %c0_1] : memref<1x8x32xf32, #tpu.memory_space<vmem>>, vector<1x8x32xf32>
    %1 = vector.shape_cast %0 : vector<1x8x32xf32> to vector<8x32xf32>
    %c0_2 = arith.constant 0 : index
    %c0_3 = arith.constant 0 : index
    %c0_4 = arith.constant 0 : index
    %2 = vector.load %arg2[%c0_2, %c0_3, %c0_4] : memref<1x1x8xf32, #tpu.memory_space<vmem>>, vector<1x1x8xf32>
    %3 = vector.shape_cast %2 : vector<1x1x8xf32> to vector<1x8xf32>
    %4 = arith.truncf %1 : vector<8x32xf32> to vector<8x32xbf16>
    %c0_5 = arith.constant 0 : index
    %c0_6 = arith.constant 0 : index
    %5 = vector.load %arg3[%c0_5, %c0_6] : memref<32x96xbf16, #tpu.memory_space<vmem>>, vector<32x96xbf16>
    %cst = arith.constant dense<0.000000e+00> : vector<8x96xf32>
    %6 = tpu.matmul %4, %5, %cst {dimension_numbers = #tpu.dot_dimension_numbers<[1], [0], [0], [1], [0, 0, 1, 1], [], []>} : vector<8x32xbf16>, vector<32x96xbf16>, vector<8x96xf32> -> vector<8x96xf32>
    %c0_7 = arith.constant 0 : index
    %c0_8 = arith.constant 0 : index
    %7 = vector.load %arg4[%c0_7, %c0_8] : memref<1x96xf32, #tpu.memory_space<vmem>>, vector<1x96xf32>
    %8 = vector.broadcast %7 : vector<1x96xf32> to vector<8x96xf32>
    %9 = arith.addf %6, %8 : vector<8x96xf32>
    %10 = vector.extract_strided_slice %9 {offsets = [0, 0], sizes = [8, 32], strides = [1, 1]} : vector<8x96xf32> to vector<8x32xf32>
    %11 = vector.extract_strided_slice %9 {offsets = [0, 32], sizes = [8, 32], strides = [1, 1]} : vector<8x96xf32> to vector<8x32xf32>
    %12 = vector.extract_strided_slice %9 {offsets = [0, 64], sizes = [8, 32], strides = [1, 1]} : vector<8x96xf32> to vector<8x32xf32>
    %13 = vector.extract_strided_slice %10 {offsets = [0, 0], sizes = [8, 16], strides = [1, 1]} : vector<8x32xf32> to vector<8x16xf32>
    %14 = vector.extract_strided_slice %11 {offsets = [0, 0], sizes = [8, 16], strides = [1, 1]} : vector<8x32xf32> to vector<8x16xf32>
    %15 = vector.extract_strided_slice %12 {offsets = [0, 0], sizes = [8, 16], strides = [1, 1]} : vector<8x32xf32> to vector<8x16xf32>
    %16 = tpu.transpose %14, [1, 0] : vector<8x16xf32> -> vector<16x8xf32>
    %cst_9 = arith.constant dense<0.000000e+00> : vector<8x8xf32>
    %17 = tpu.matmul %13, %16, %cst_9 {dimension_numbers = #tpu.dot_dimension_numbers<[1], [0], [0], [1], [0, 0, 1, 1], [], []>} : vector<8x16xf32>, vector<16x8xf32>, vector<8x8xf32> -> vector<8x8xf32>
    %cst_10 = arith.constant 2.500000e-01 : f32
    %18 = vector.broadcast %cst_10 : f32 to vector<8x8xf32>
    %19 = arith.mulf %17, %18 : vector<8x8xf32>
    %cst_11 = arith.constant 0.000000e+00 : f32
    %20 = vector.broadcast %cst_11 : f32 to vector<1x8xf32>
    %21 = arith.cmpf ogt, %3, %20 : vector<1x8xf32>
    %cst_12 = arith.constant -1.000000e+30 : f32
    %22 = vector.shape_cast %21 : vector<1x8xi1> to vector<1x8xi1>
    %23 = vector.broadcast %22 : vector<1x8xi1> to vector<8x8xi1>
    %24 = vector.broadcast %cst_12 : f32 to vector<8x8xf32>
    %25 = arith.select %23, %19, %24 : vector<8x8xi1>, vector<8x8xf32>
    %cst_13 = arith.constant dense<0xFF800000> : vector<8xf32>
    %26 = vector.multi_reduction <maximumf>, %25, %cst_13 [1] : vector<8x8xf32> to vector<8xf32>
    %27 = vector.shape_cast %26 : vector<8xf32> to vector<8x1xf32>
    %28 = vector.broadcast %27 : vector<8x1xf32> to vector<8x8xf32>
    %29 = arith.subf %25, %28 : vector<8x8xf32>
    %30 = math.exp %29 : vector<8x8xf32>
    %cst_14 = arith.constant dense<0.000000e+00> : vector<8xf32>
    %31 = vector.multi_reduction <add>, %30, %cst_14 [1] : vector<8x8xf32> to vector<8xf32>
    %32 = vector.shape_cast %31 : vector<8xf32> to vector<8x1xf32>
    %33 = tpu.reciprocal %32 {approx = true} : vector<8x1xf32> -> vector<8x1xf32>
    %34 = vector.broadcast %33 : vector<8x1xf32> to vector<8x8xf32>
    %35 = arith.mulf %30, %34 : vector<8x8xf32>
    %cst_15 = arith.constant dense<0.000000e+00> : vector<8x16xf32>
    %36 = tpu.matmul %35, %15, %cst_15 {dimension_numbers = #tpu.dot_dimension_numbers<[1], [0], [0], [1], [0, 0, 1, 1], [], []>} : vector<8x8xf32>, vector<8x16xf32>, vector<8x16xf32> -> vector<8x16xf32>
    %37 = vector.extract_strided_slice %10 {offsets = [0, 16], sizes = [8, 16], strides = [1, 1]} : vector<8x32xf32> to vector<8x16xf32>
    %38 = vector.extract_strided_slice %11 {offsets = [0, 16], sizes = [8, 16], strides = [1, 1]} : vector<8x32xf32> to vector<8x16xf32>
    %39 = vector.extract_strided_slice %12 {offsets = [0, 16], sizes = [8, 16], strides = [1, 1]} : vector<8x32xf32> to vector<8x16xf32>
    %40 = tpu.transpose %38, [1, 0] : vector<8x16xf32> -> vector<16x8xf32>
    %cst_16 = arith.constant dense<0.000000e+00> : vector<8x8xf32>
    %41 = tpu.matmul %37, %40, %cst_16 {dimension_numbers = #tpu.dot_dimension_numbers<[1], [0], [0], [1], [0, 0, 1, 1], [], []>} : vector<8x16xf32>, vector<16x8xf32>, vector<8x8xf32> -> vector<8x8xf32>
    %cst_17 = arith.constant 2.500000e-01 : f32
    %42 = vector.broadcast %cst_17 : f32 to vector<8x8xf32>
    %43 = arith.mulf %41, %42 : vector<8x8xf32>
    %cst_18 = arith.constant 0.000000e+00 : f32
    %44 = vector.broadcast %cst_18 : f32 to vector<1x8xf32>
    %45 = arith.cmpf ogt, %3, %44 : vector<1x8xf32>
    %cst_19 = arith.constant -1.000000e+30 : f32
    %46 = vector.shape_cast %45 : vector<1x8xi1> to vector<1x8xi1>
    %47 = vector.broadcast %46 : vector<1x8xi1> to vector<8x8xi1>
    %48 = vector.broadcast %cst_19 : f32 to vector<8x8xf32>
    %49 = arith.select %47, %43, %48 : vector<8x8xi1>, vector<8x8xf32>
    %cst_20 = arith.constant dense<0xFF800000> : vector<8xf32>
    %50 = vector.multi_reduction <maximumf>, %49, %cst_20 [1] : vector<8x8xf32> to vector<8xf32>
    %51 = vector.shape_cast %50 : vector<8xf32> to vector<8x1xf32>
    %52 = vector.broadcast %51 : vector<8x1xf32> to vector<8x8xf32>
    %53 = arith.subf %49, %52 : vector<8x8xf32>
    %54 = math.exp %53 : vector<8x8xf32>
    %cst_21 = arith.constant dense<0.000000e+00> : vector<8xf32>
    %55 = vector.multi_reduction <add>, %54, %cst_21 [1] : vector<8x8xf32> to vector<8xf32>
    %56 = vector.shape_cast %55 : vector<8xf32> to vector<8x1xf32>
    %57 = tpu.reciprocal %56 {approx = true} : vector<8x1xf32> -> vector<8x1xf32>
    %58 = vector.broadcast %57 : vector<8x1xf32> to vector<8x8xf32>
    %59 = arith.mulf %54, %58 : vector<8x8xf32>
    %cst_22 = arith.constant dense<0.000000e+00> : vector<8x16xf32>
    %60 = tpu.matmul %59, %39, %cst_22 {dimension_numbers = #tpu.dot_dimension_numbers<[1], [0], [0], [1], [0, 0, 1, 1], [], []>} : vector<8x8xf32>, vector<8x16xf32>, vector<8x16xf32> -> vector<8x16xf32>
    %61 = tpu.concatenate %36, %60 in 1 : vector<8x16xf32>, vector<8x16xf32> -> vector<8x32xf32>
    %62 = arith.truncf %61 : vector<8x32xf32> to vector<8x32xbf16>
    %c0_23 = arith.constant 0 : index
    %c0_24 = arith.constant 0 : index
    %63 = vector.load %arg5[%c0_23, %c0_24] : memref<32x32xbf16, #tpu.memory_space<vmem>>, vector<32x32xbf16>
    %cst_25 = arith.constant dense<0.000000e+00> : vector<8x32xf32>
    %64 = tpu.matmul %62, %63, %cst_25 {dimension_numbers = #tpu.dot_dimension_numbers<[1], [0], [0], [1], [0, 0, 1, 1], [], []>} : vector<8x32xbf16>, vector<32x32xbf16>, vector<8x32xf32> -> vector<8x32xf32>
    %c0_26 = arith.constant 0 : index
    %c0_27 = arith.constant 0 : index
    %65 = vector.load %arg6[%c0_26, %c0_27] : memref<1x32xf32, #tpu.memory_space<vmem>>, vector<1x32xf32>
    %66 = vector.broadcast %65 : vector<1x32xf32> to vector<8x32xf32>
    %67 = arith.addf %64, %66 : vector<8x32xf32>
    %68 = arith.addf %1, %67 : vector<8x32xf32>
    %cst_28 = arith.constant dense<0.000000e+00> : vector<8xf32>
    %69 = vector.multi_reduction <add>, %68, %cst_28 [1] : vector<8x32xf32> to vector<8xf32>
    %70 = vector.shape_cast %69 : vector<8xf32> to vector<8x1xf32>
    %cst_29 = arith.constant 3.200000e+01 : f32
    %71 = vector.broadcast %cst_29 : f32 to vector<8x1xf32>
    %72 = arith.divf %70, %71 : vector<8x1xf32>
    %73 = vector.broadcast %72 : vector<8x1xf32> to vector<8x32xf32>
    %74 = arith.subf %68, %73 : vector<8x32xf32>
    %75 = arith.mulf %74, %74 : vector<8x32xf32>
    %cst_30 = arith.constant dense<0.000000e+00> : vector<8xf32>
    %76 = vector.multi_reduction <add>, %75, %cst_30 [1] : vector<8x32xf32> to vector<8xf32>
    %77 = vector.shape_cast %76 : vector<8xf32> to vector<8x1xf32>
    %cst_31 = arith.constant 3.200000e+01 : f32
    %78 = vector.broadcast %cst_31 : f32 to vector<8x1xf32>
    %79 = arith.divf %77, %78 : vector<8x1xf32>
    %80 = vector.broadcast %72 : vector<8x1xf32> to vector<8x32xf32>
    %81 = arith.subf %68, %80 : vector<8x32xf32>
    %cst_32 = arith.constant 9.99999996E-13 : f32
    %82 = vector.broadcast %cst_32 : f32 to vector<8x1xf32>
    %83 = arith.addf %79, %82 : vector<8x1xf32>
    %84 = math.rsqrt %83 : vector<8x1xf32>
    %85 = vector.broadcast %84 : vector<8x1xf32> to vector<8x32xf32>
    %86 = arith.mulf %81, %85 : vector<8x32xf32>
    %c0_33 = arith.constant 0 : index
    %c0_34 = arith.constant 0 : index
    %87 = vector.load %arg7[%c0_33, %c0_34] : memref<1x32xf32, #tpu.memory_space<vmem>>, vector<1x32xf32>
    %88 = vector.broadcast %87 : vector<1x32xf32> to vector<8x32xf32>
    %89 = arith.mulf %86, %88 : vector<8x32xf32>
    %c0_35 = arith.constant 0 : index
    %c0_36 = arith.constant 0 : index
    %90 = vector.load %arg8[%c0_35, %c0_36] : memref<1x32xf32, #tpu.memory_space<vmem>>, vector<1x32xf32>
    %91 = vector.broadcast %90 : vector<1x32xf32> to vector<8x32xf32>
    %92 = arith.addf %89, %91 : vector<8x32xf32>
    %93 = arith.truncf %92 : vector<8x32xf32> to vector<8x32xbf16>
    %c0_37 = arith.constant 0 : index
    %c0_38 = arith.constant 0 : index
    %94 = vector.load %arg9[%c0_37, %c0_38] : memref<32x64xbf16, #tpu.memory_space<vmem>>, vector<32x64xbf16>
    %cst_39 = arith.constant dense<0.000000e+00> : vector<8x64xf32>
    %95 = tpu.matmul %93, %94, %cst_39 {dimension_numbers = #tpu.dot_dimension_numbers<[1], [0], [0], [1], [0, 0, 1, 1], [], []>} : vector<8x32xbf16>, vector<32x64xbf16>, vector<8x64xf32> -> vector<8x64xf32>
    %c0_40 = arith.constant 0 : index
    %c0_41 = arith.constant 0 : index
    %96 = vector.load %arg10[%c0_40, %c0_41] : memref<1x64xf32, #tpu.memory_space<vmem>>, vector<1x64xf32>
    %97 = vector.broadcast %96 : vector<1x64xf32> to vector<8x64xf32>
    %98 = arith.addf %95, %97 : vector<8x64xf32>
    %99 = arith.mulf %98, %98 : vector<8x64xf32>
    %100 = arith.mulf %98, %99 : vector<8x64xf32>
    %cst_42 = arith.constant 4.471500e-02 : f32
    %101 = vector.broadcast %cst_42 : f32 to vector<8x64xf32>
    %102 = arith.mulf %101, %100 : vector<8x64xf32>
    %103 = arith.addf %98, %102 : vector<8x64xf32>
    %cst_43 = arith.constant 0.797884583 : f32
    %104 = vector.broadcast %cst_43 : f32 to vector<8x64xf32>
    %105 = arith.mulf %104, %103 : vector<8x64xf32>
    %106 = math.tanh %105 : vector<8x64xf32>
    %cst_44 = arith.constant 1.000000e+00 : f32
    %107 = vector.broadcast %cst_44 : f32 to vector<8x64xf32>
    %108 = arith.addf %107, %106 : vector<8x64xf32>
    %cst_45 = arith.constant 5.000000e-01 : f32
    %109 = vector.broadcast %cst_45 : f32 to vector<8x64xf32>
    %110 = arith.mulf %109, %108 : vector<8x64xf32>
    %111 = arith.mulf %98, %110 : vector<8x64xf32>
    %112 = arith.truncf %111 : vector<8x64xf32> to vector<8x64xbf16>
    %c0_46 = arith.constant 0 : index
    %c0_47 = arith.constant 0 : index
    %113 = vector.load %arg11[%c0_46, %c0_47] : memref<64x32xbf16, #tpu.memory_space<vmem>>, vector<64x32xbf16>
    %cst_48 = arith.constant dense<0.000000e+00> : vector<8x32xf32>
    %114 = tpu.matmul %112, %113, %cst_48 {dimension_numbers = #tpu.dot_dimension_numbers<[1], [0], [0], [1], [0, 0, 1, 1], [], []>} : vector<8x64xbf16>, vector<64x32xbf16>, vector<8x32xf32> -> vector<8x32xf32>
    %c0_49 = arith.constant 0 : index
    %c0_50 = arith.constant 0 : index
    %115 = vector.load %arg12[%c0_49, %c0_50] : memref<1x32xf32, #tpu.memory_space<vmem>>, vector<1x32xf32>
    %116 = vector.broadcast %115 : vector<1x32xf32> to vector<8x32xf32>
    %117 = arith.addf %114, %116 : vector<8x32xf32>
    %118 = arith.addf %92, %117 : vector<8x32xf32>
    %cst_51 = arith.constant dense<0.000000e+00> : vector<8xf32>
    %119 = vector.multi_reduction <add>, %118, %cst_51 [1] : vector<8x32xf32> to vector<8xf32>
    %120 = vector.shape_cast %119 : vector<8xf32> to vector<8x1xf32>
    %cst_52 = arith.constant 3.200000e+01 : f32
    %121 = vector.broadcast %cst_52 : f32 to vector<8x1xf32>
    %122 = arith.divf %120, %121 : vector<8x1xf32>
    %123 = vector.broadcast %122 : vector<8x1xf32> to vector<8x32xf32>
    %124 = arith.subf %118, %123 : vector<8x32xf32>
    %125 = arith.mulf %124, %124 : vector<8x32xf32>
    %cst_53 = arith.constant dense<0.000000e+00> : vector<8xf32>
    %126 = vector.multi_reduction <add>, %125, %cst_53 [1] : vector<8x32xf32> to vector<8xf32>
    %127 = vector.shape_cast %126 : vector<8xf32> to vector<8x1xf32>
    %cst_54 = arith.constant 3.200000e+01 : f32
    %128 = vector.broadcast %cst_54 : f32 to vector<8x1xf32>
    %129 = arith.divf %127, %128 : vector<8x1xf32>
    %130 = vector.broadcast %122 : vector<8x1xf32> to vector<8x32xf32>
    %131 = arith.subf %118, %130 : vector<8x32xf32>
    %cst_55 = arith.constant 9.99999996E-13 : f32
    %132 = vector.broadcast %cst_55 : f32 to vector<8x1xf32>
    %133 = arith.addf %129, %132 : vector<8x1xf32>
    %134 = math.rsqrt %133 : vector<8x1xf32>
    %135 = vector.broadcast %134 : vector<8x1xf32> to vector<8x32xf32>
    %136 = arith.mulf %131, %135 : vector<8x32xf32>
    %c0_56 = arith.constant 0 : index
    %c0_57 = arith.constant 0 : index
    %137 = vector.load %arg13[%c0_56, %c0_57] : memref<1x32xf32, #tpu.memory_space<vmem>>, vector<1x32xf32>
    %138 = vector.broadcast %137 : vector<1x32xf32> to vector<8x32xf32>
    %139 = arith.mulf %136, %138 : vector<8x32xf32>
    %c0_58 = arith.constant 0 : index
    %c0_59 = arith.constant 0 : index
    %140 = vector.load %arg14[%c0_58, %c0_59] : memref<1x32xf32, #tpu.memory_space<vmem>>, vector<1x32xf32>
    %141 = vector.broadcast %140 : vector<1x32xf32> to vector<8x32xf32>
    %142 = arith.addf %139, %141 : vector<8x32xf32>
    %c0_60 = arith.constant 0 : index
    %c0_61 = arith.constant 0 : index
    %c0_62 = arith.constant 0 : index
    %143 = vector.load %arg15[%c0_60, %c0_61, %c0_62] : memref<1x8x32xf32, #tpu.memory_space<vmem>>, vector<1x8x32xf32>
    %144 = vector.shape_cast %143 : vector<1x8x32xf32> to vector<8x32xf32>
    %145 = vector.shape_cast %142 : vector<8x32xf32> to vector<1x8x32xf32>
    tpu.vector_store %arg15[%c0_60, %c0_61, %c0_62], %145 {strides = array<i32>} : memref<1x8x32xf32, #tpu.memory_space<vmem>>, vector<1x8x32xf32>,
    return
  }
  func.func @transform_0(%arg0: i32) -> (i32, i32, i32) {
    %c0_i32 = arith.constant 0 : i32
    %c0_i32_0 = arith.constant 0 : i32
    %c0_i32_1 = arith.constant 0 : i32
    return %arg0, %c0_i32, %c0_i32_0 : i32, i32, i32
  }
  func.func @transform_1(%arg0: i32) -> (i32, i32, i32) {
    %c0_i32 = arith.constant 0 : i32
    %c0_i32_0 = arith.constant 0 : i32
    %c0_i32_1 = arith.constant 0 : i32
    return %arg0, %c0_i32, %c0_i32_0 : i32, i32, i32
  }
  func.func @transform_2(%arg0: i32) -> (i32, i32) {
    %c0_i32 = arith.constant 0 : i32
    %c0_i32_0 = arith.constant 0 : i32
    %c0_i32_1 = arith.constant 0 : i32
    return %c0_i32, %c0_i32_0 : i32, i32
  }
  func.func @transform_3(%arg0: i32) -> (i32, i32) {
    %c0_i32 = arith.constant 0 : i32
    %c0_i32_0 = arith.constant 0 : i32
    %c0_i32_1 = arith.constant 0 : i32
    return %c0_i32, %c0_i32_0 : i32, i32
  }
  func.func @transform_4(%arg0: i32) -> (i32, i32) {
    %c0_i32 = arith.constant 0 : i32
    %c0_i32_0 = arith.constant 0 : i32
    %c0_i32_1 = arith.constant 0 : i32
    return %c0_i32, %c0_i32_0 : i32, i32
  }
  func.func @transform_5(%arg0: i32) -> (i32, i32) {
    %c0_i32 = arith.constant 0 : i32
    %c0_i32_0 = arith.constant 0 : i32
    %c0_i32_1 = arith.constant 0 : i32
    return %c0_i32, %c0_i32_0 : i32, i32
  }
  func.func @transform_6(%arg0: i32) -> (i32, i32) {
    %c0_i32 = arith.constant 0 : i32
    %c0_i32_0 = arith.constant 0 : i32
    %c0_i32_1 = arith.constant 0 : i32
    return %c0_i32, %c0_i32_0 : i32, i32
  }
  func.func @transform_7(%arg0: i32) -> (i32, i32) {
    %c0_i32 = arith.constant 0 : i32
    %c0_i32_0 = arith.constant 0 : i32
    %c0_i32_1 = arith.constant 0 : i32
    return %c0_i32, %c0_i32_0 : i32, i32
  }
  func.func @transform_8(%arg0: i32) -> (i32, i32) {
    %c0_i32 = arith.constant 0 : i32
    %c0_i32_0 = arith.constant 0 : i32
    %c0_i32_1 = arith.constant 0 : i32
    return %c0_i32, %c0_i32_0 : i32, i32
  }
  func.func @transform_9(%arg0: i32) -> (i32, i32) {
    %c0_i32 = arith.constant 0 : i32
    %c0_i32_0 = arith.constant 0 : i32
    %c0_i32_1 = arith.constant 0 : i32
    return %c0_i32, %c0_i32_0 : i32, i32
  }
  func.func @transform_10(%arg0: i32) -> (i32, i32) {
    %c0_i32 = arith.constant 0 : i32
    %c0_i32_0 = arith.constant 0 : i32
    %c0_i32_1 = arith.constant 0 : i32
    return %c0_i32, %c0_i32_0 : i32, i32
  }
  func.func @transform_11(%arg0: i32) -> (i32, i32) {
    %c0_i32 = arith.constant 0 : i32
    %c0_i32_0 = arith.constant 0 : i32
    %c0_i32_1 = arith.constant 0 : i32
    return %c0_i32, %c0_i32_0 : i32, i32
  }
  func.func @transform_12(%arg0: i32) -> (i32, i32) {
    %c0_i32 = arith.constant 0 : i32
    %c0_i32_0 = arith.constant 0 : i32
    %c0_i32_1 = arith.constant 0 : i32
    return %c0_i32, %c0_i32_0 : i32, i32
  }
  func.func @transform_13(%arg0: i32) -> (i32, i32) {
    %c0_i32 = arith.constant 0 : i32
    %c0_i32_0 = arith.constant 0 : i32
    %c0_i32_1 = arith.constant 0 : i32
    return %c0_i32, %c0_i32_0 : i32, i32
  }
  func.func @transform_14(%arg0: i32) -> (i32, i32, i32) {
    %c0_i32 = arith.constant 0 : i32
    %c0_i32_0 = arith.constant 0 : i32
    %c0_i32_1 = arith.constant 0 : i32
    return %arg0, %c0_i32, %c0_i32_0 : i32, i32, i32
  }
}

module attributes {stable_mosaic.version = 11 : i64} {
  func.func @_head_kernel(%arg0: i32, %arg1: memref<2x32xf32, #tpu.memory_space<vmem>>, %arg2: memref<32x128xbf16, #tpu.memory_space<vmem>>, %arg3: memref<1x128xf32, #tpu.memory_space<vmem>>, %arg4: memref<128x128xbf16, #tpu.memory_space<vmem>>, %arg5: memref<1x128xf32, #tpu.memory_space<vmem>>, %arg6: memref<128x128xbf16, #tpu.memory_space<vmem>>, %arg7: memref<1x128xf32, #tpu.memory_space<vmem>>, %arg8: memref<128x128xbf16, #tpu.memory_space<vmem>>, %arg9: memref<1x128xf32, #tpu.memory_space<vmem>>, %arg10: memref<2x128xf32, #tpu.memory_space<vmem>>) attributes {dimension_semantics = [#tpu.dimension_semantics<arbitrary>], iteration_bounds = array<i64: 1>, scalar_prefetch = 0 : i64, scratch_operands = 0 : i64, tpu.core_type = #tpu.core_type<tc>, window_params = [{pipeline_mode = #tpu.pipeline_mode<synchronous>, transform_indices = @transform_0, window_bounds = array<i64: 2, 32>}, {pipeline_mode = #tpu.pipeline_mode<synchronous>, transform_indices = @transform_1, window_bounds = array<i64: 32, 128>}, {pipeline_mode = #tpu.pipeline_mode<synchronous>, transform_indices = @transform_2, window_bounds = array<i64: 1, 128>}, {pipeline_mode = #tpu.pipeline_mode<synchronous>, transform_indices = @transform_3, window_bounds = array<i64: 128, 128>}, {pipeline_mode = #tpu.pipeline_mode<synchronous>, transform_indices = @transform_4, window_bounds = array<i64: 1, 128>}, {pipeline_mode = #tpu.pipeline_mode<synchronous>, transform_indices = @transform_5, window_bounds = array<i64: 128, 128>}, {pipeline_mode = #tpu.pipeline_mode<synchronous>, transform_indices = @transform_6, window_bounds = array<i64: 1, 128>}, {pipeline_mode = #tpu.pipeline_mode<synchronous>, transform_indices = @transform_7, window_bounds = array<i64: 128, 128>}, {pipeline_mode = #tpu.pipeline_mode<synchronous>, transform_indices = @transform_8, window_bounds = array<i64: 1, 128>}, {pipeline_mode = #tpu.pipeline_mode<synchronous>, transform_indices = @transform_9, window_bounds = array<i64: 2, 128>}]} {
    %c0 = arith.constant 0 : index
    %c0_0 = arith.constant 0 : index
    %0 = vector.load %arg1[%c0, %c0_0] : memref<2x32xf32, #tpu.memory_space<vmem>>, vector<2x32xf32>
    %1 = arith.truncf %0 : vector<2x32xf32> to vector<2x32xbf16>
    %c0_1 = arith.constant 0 : index
    %c0_2 = arith.constant 0 : index
    %2 = vector.load %arg2[%c0_1, %c0_2] : memref<32x128xbf16, #tpu.memory_space<vmem>>, vector<32x128xbf16>
    %cst = arith.constant dense<0.000000e+00> : vector<2x128xf32>
    %3 = tpu.matmul %1, %2, %cst {dimension_numbers = #tpu.dot_dimension_numbers<[1], [0], [0], [1], [0, 0, 1, 1], [], []>} : vector<2x32xbf16>, vector<32x128xbf16>, vector<2x128xf32> -> vector<2x128xf32>
    %c0_3 = arith.constant 0 : index
    %c0_4 = arith.constant 0 : index
    %4 = vector.load %arg3[%c0_3, %c0_4] : memref<1x128xf32, #tpu.memory_space<vmem>>, vector<1x128xf32>
    %5 = vector.broadcast %4 : vector<1x128xf32> to vector<2x128xf32>
    %6 = arith.addf %3, %5 : vector<2x128xf32>
    %cst_5 = arith.constant 0.000000e+00 : f32
    %7 = vector.broadcast %cst_5 : f32 to vector<2x128xf32>
    %8 = arith.maximumf %6, %7 : vector<2x128xf32>
    %9 = arith.truncf %8 : vector<2x128xf32> to vector<2x128xbf16>
    %c0_6 = arith.constant 0 : index
    %c0_7 = arith.constant 0 : index
    %10 = vector.load %arg4[%c0_6, %c0_7] : memref<128x128xbf16, #tpu.memory_space<vmem>>, vector<128x128xbf16>
    %cst_8 = arith.constant dense<0.000000e+00> : vector<2x128xf32>
    %11 = tpu.matmul %9, %10, %cst_8 {dimension_numbers = #tpu.dot_dimension_numbers<[1], [0], [0], [1], [0, 0, 1, 1], [], []>} : vector<2x128xbf16>, vector<128x128xbf16>, vector<2x128xf32> -> vector<2x128xf32>
    %c0_9 = arith.constant 0 : index
    %c0_10 = arith.constant 0 : index
    %12 = vector.load %arg5[%c0_9, %c0_10] : memref<1x128xf32, #tpu.memory_space<vmem>>, vector<1x128xf32>
    %13 = vector.broadcast %12 : vector<1x128xf32> to vector<2x128xf32>
    %14 = arith.addf %11, %13 : vector<2x128xf32>
    %15 = arith.truncf %14 : vector<2x128xf32> to vector<2x128xbf16>
    %c0_11 = arith.constant 0 : index
    %c0_12 = arith.constant 0 : index
    %16 = vector.load %arg6[%c0_11, %c0_12] : memref<128x128xbf16, #tpu.memory_space<vmem>>, vector<128x128xbf16>
    %cst_13 = arith.constant dense<0.000000e+00> : vector<2x128xf32>
    %17 = tpu.matmul %15, %16, %cst_13 {dimension_numbers = #tpu.dot_dimension_numbers<[1], [0], [0], [1], [0, 0, 1, 1], [], []>} : vector<2x128xbf16>, vector<128x128xbf16>, vector<2x128xf32> -> vector<2x128xf32>
    %c0_14 = arith.constant 0 : index
    %c0_15 = arith.constant 0 : index
    %18 = vector.load %arg7[%c0_14, %c0_15] : memref<1x128xf32, #tpu.memory_space<vmem>>, vector<1x128xf32>
    %19 = vector.broadcast %18 : vector<1x128xf32> to vector<2x128xf32>
    %20 = arith.addf %17, %19 : vector<2x128xf32>
    %cst_16 = arith.constant 0.000000e+00 : f32
    %21 = vector.broadcast %cst_16 : f32 to vector<2x128xf32>
    %22 = arith.maximumf %20, %21 : vector<2x128xf32>
    %23 = arith.truncf %22 : vector<2x128xf32> to vector<2x128xbf16>
    %c0_17 = arith.constant 0 : index
    %c0_18 = arith.constant 0 : index
    %24 = vector.load %arg8[%c0_17, %c0_18] : memref<128x128xbf16, #tpu.memory_space<vmem>>, vector<128x128xbf16>
    %cst_19 = arith.constant dense<0.000000e+00> : vector<2x128xf32>
    %25 = tpu.matmul %23, %24, %cst_19 {dimension_numbers = #tpu.dot_dimension_numbers<[1], [0], [0], [1], [0, 0, 1, 1], [], []>} : vector<2x128xbf16>, vector<128x128xbf16>, vector<2x128xf32> -> vector<2x128xf32>
    %c0_20 = arith.constant 0 : index
    %c0_21 = arith.constant 0 : index
    %26 = vector.load %arg9[%c0_20, %c0_21] : memref<1x128xf32, #tpu.memory_space<vmem>>, vector<1x128xf32>
    %27 = vector.broadcast %26 : vector<1x128xf32> to vector<2x128xf32>
    %28 = arith.addf %25, %27 : vector<2x128xf32>
    %cst_22 = arith.constant 0.000000e+00 : f32
    %29 = vector.broadcast %cst_22 : f32 to vector<2x128xf32>
    %30 = arith.maximumf %28, %29 : vector<2x128xf32>
    %31 = vector.broadcast %cst_22 : f32 to vector<2x128xf32>
    %32 = arith.subf %28, %31 : vector<2x128xf32>
    %33 = arith.cmpf one, %32, %32 : vector<2x128xf32>
    %34 = vector.broadcast %cst_22 : f32 to vector<2x128xf32>
    %35 = arith.addf %28, %34 : vector<2x128xf32>
    %36 = math.absf %32 : vector<2x128xf32>
    %cst_23 = arith.constant 0.000000e+00 : f32
    %37 = vector.broadcast %cst_23 : f32 to vector<2x128xf32>
    %38 = arith.subf %37, %36 : vector<2x128xf32>
    %39 = math.exp %38 : vector<2x128xf32>
    %40 = math.log1p %39 : vector<2x128xf32>
    %41 = arith.addf %30, %40 : vector<2x128xf32>
    %42 = arith.select %33, %35, %41 : vector<2x128xi1>, vector<2x128xf32>
    %c0_24 = arith.constant 0 : index
    %c0_25 = arith.constant 0 : index
    %43 = vector.load %arg10[%c0_24, %c0_25] : memref<2x128xf32, #tpu.memory_space<vmem>>, vector<2x128xf32>
    tpu.vector_store %arg10[%c0_24, %c0_25], %42 {strides = array<i32>} : memref<2x128xf32, #tpu.memory_space<vmem>>, vector<2x128xf32>,
    return
  }
  func.func @transform_0(%arg0: i32) -> (i32, i32) {
    %c0_i32 = arith.constant 0 : i32
    %c0_i32_0 = arith.constant 0 : i32
    %c0_i32_1 = arith.constant 0 : i32
    return %c0_i32, %c0_i32_0 : i32, i32
  }
  func.func @transform_1(%arg0: i32) -> (i32, i32) {
    %c0_i32 = arith.constant 0 : i32
    %c0_i32_0 = arith.constant 0 : i32
    %c0_i32_1 = arith.constant 0 : i32
    return %c0_i32, %c0_i32_0 : i32, i32
  }
  func.func @transform_2(%arg0: i32) -> (i32, i32) {
    %c0_i32 = arith.constant 0 : i32
    %c0_i32_0 = arith.constant 0 : i32
    %c0_i32_1 = arith.constant 0 : i32
    return %c0_i32, %c0_i32_0 : i32, i32
  }
  func.func @transform_3(%arg0: i32) -> (i32, i32) {
    %c0_i32 = arith.constant 0 : i32
    %c0_i32_0 = arith.constant 0 : i32
    %c0_i32_1 = arith.constant 0 : i32
    return %c0_i32, %c0_i32_0 : i32, i32
  }
  func.func @transform_4(%arg0: i32) -> (i32, i32) {
    %c0_i32 = arith.constant 0 : i32
    %c0_i32_0 = arith.constant 0 : i32
    %c0_i32_1 = arith.constant 0 : i32
    return %c0_i32, %c0_i32_0 : i32, i32
  }
  func.func @transform_5(%arg0: i32) -> (i32, i32) {
    %c0_i32 = arith.constant 0 : i32
    %c0_i32_0 = arith.constant 0 : i32
    %c0_i32_1 = arith.constant 0 : i32
    return %c0_i32, %c0_i32_0 : i32, i32
  }
  func.func @transform_6(%arg0: i32) -> (i32, i32) {
    %c0_i32 = arith.constant 0 : i32
    %c0_i32_0 = arith.constant 0 : i32
    %c0_i32_1 = arith.constant 0 : i32
    return %c0_i32, %c0_i32_0 : i32, i32
  }
  func.func @transform_7(%arg0: i32) -> (i32, i32) {
    %c0_i32 = arith.constant 0 : i32
    %c0_i32_0 = arith.constant 0 : i32
    %c0_i32_1 = arith.constant 0 : i32
    return %c0_i32, %c0_i32_0 : i32, i32
  }
  func.func @transform_8(%arg0: i32) -> (i32, i32) {
    %c0_i32 = arith.constant 0 : i32
    %c0_i32_0 = arith.constant 0 : i32
    %c0_i32_1 = arith.constant 0 : i32
    return %c0_i32, %c0_i32_0 : i32, i32
  }
  func.func @transform_9(%arg0: i32) -> (i32, i32) {
    %c0_i32 = arith.constant 0 : i32
    %c0_i32_0 = arith.constant 0 : i32
    %c0_i32_1 = arith.constant 0 : i32
    return %c0_i32, %c0_i32_0 : i32, i32
  }
}

</mosaic_0001>

<llo_original>
// kernel: _lambda_.4
$region0: #{_lambda_.4}
  #allocation0 [shape = 'u32[]', space=smem, size = 0x4, offset = 0x4, fixed_abs, tag = 'smem constant byte address 0x4 - core index']
  #allocation1 [shape = 'u32[144,128]{1,0:T(1,128)}', space=vmem, size = 0x12000, scoped, tag = 'internal scratch']
  %s0 = inlined_call_operand.vmem [shape: f32[2,8,32], index: 0, kind: input, shape index: {}]
  %s1 = inlined_call_operand.vmem [shape: f32[1,32], index: 1, kind: input, shape index: {}]
  %s2 = inlined_call_operand.vmem [shape: f32[1,32], index: 2, kind: input, shape index: {}]
  %s3 = inlined_call_operand.vmem [shape: f32[2,8,32], index: 3, kind: output, shape index: {}]
  %s4 = sld [smem:[#allocation0]]
  $region45: #{_lambda_.4} parent=0
    _
  %s6 = ssub.s32 1, %s4
  %s7 = scalar_select 0, %s6, %s4
  loop: start=0, step=1, limit=4
  $region2: #{_lambda_.4} parent=0 // loop_pre_header
    _
  $region3: #{_lambda_.4} parent=0 // loop_header
    %s9 = sphi 0, %s13
    %p10 = scmp.ge.s32.totalorder %s9, 4
    %s19 = sphi 0, %s21
    %s22 = sphi 0, %s19
    %s23 = sphi 0, %s22
    %s39 = sphi 0, %s23
    %s43 = sphi 0, %s43
    %s45 = sphi 0, %s43
    %s46 = sphi 0, %s45
    %s60 = sphi 0, %s46
    %s64 = sphi 0, %s64
    %s66 = sphi 0, %s64
    %s67 = sphi 0, %s66
    %s81 = sphi 0, %s67
    %s87 = sphi 0, %s89
    %s90 = sphi 0, %s87
    %s91 = sphi 0, %s90
    %s107 = sphi 0, %s91
  $region4: #{_lambda_.4} parent=0 // loop_header_branch
    %12 = sbr.rel (%p10) target = $region8
  $region5: #{_lambda_.4} parent=0 // loop_body
    %s14 = ssub.s32 %s9, 1
    %s15 = ssub.s32 %s9, 2
    %s16 = sadd.s32 %s9, 1
    %s17 = ssub.s32 %s9, %s16
    %p18 = scmp.eq.s32.totalorder %s17, 0
    %s20 = sadd.s32 %s19, 1
    %s21 = scalar_select %p18, %s19, %s20
    %p24 = pneg %p18
    %p25 = scmp.eq.s32.totalorder %s9, 1
    %p26 = por %p24, %p25
    %p27 = scmp.ne.s32.totalorder %s19, %s22
    %p28 = scmp.eq.s32.totalorder %s9, 0
    %p29 = por %p27, %p28
    %p30 = scmp.ne.s32.totalorder %s19, %s22
    %p31 = scmp.eq.s32.totalorder %s14, 1
    %p32 = por %p30, %p31
    %p33 = scmp.ne.s32.totalorder %s22, %s23
    %p34 = scmp.eq.s32.totalorder %s14, 0
    %p35 = por %p33, %p34
    %p36 = scmp.ne.s32.totalorder %s22, %s23
    %p37 = scmp.eq.s32.totalorder %s15, 1
    %p38 = por %p36, %p37
    %p40 = scmp.ne.s32.totalorder %s23, %s39
    %p41 = scmp.eq.s32.totalorder %s15, 0
    %p42 = por %p40, %p41
    %s44 = sadd.s32 %s43, 1
    %p47 = scmp.eq.s32.totalorder %s9, 1
    %p48 = scmp.ne.s32.totalorder %s43, %s45
    %p49 = scmp.eq.s32.totalorder %s9, 0
    %p50 = por %p48, %p49
    %p51 = scmp.ne.s32.totalorder %s43, %s45
    %p52 = scmp.eq.s32.totalorder %s14, 1
    %p53 = por %p51, %p52
    %p54 = scmp.ne.s32.totalorder %s45, %s46
    %p55 = scmp.eq.s32.totalorder %s14, 0
    %p56 = por %p54, %p55
    %p57 = scmp.ne.s32.totalorder %s45, %s46
    %p58 = scmp.eq.s32.totalorder %s15, 1
    %p59 = por %p57, %p58
    %p61 = scmp.ne.s32.totalorder %s46, %s60
    %p62 = scmp.eq.s32.totalorder %s15, 0
    %p63 = por %p61, %p62
    %s65 = sadd.s32 %s64, 1
    %p68 = scmp.eq.s32.totalorder %s9, 1
    %p69 = scmp.ne.s32.totalorder %s64, %s66
    %p70 = scmp.eq.s32.totalorder %s9, 0
    %p71 = por %p69, %p70
    %p72 = scmp.ne.s32.totalorder %s64, %s66
    %p73 = scmp.eq.s32.totalorder %s14, 1
    %p74 = por %p72, %p73
    %p75 = scmp.ne.s32.totalorder %s66, %s67
    %p76 = scmp.eq.s32.totalorder %s14, 0
    %p77 = por %p75, %p76
    %p78 = scmp.ne.s32.totalorder %s66, %s67
    %p79 = scmp.eq.s32.totalorder %s15, 1
    %p80 = por %p78, %p79
    %p82 = scmp.ne.s32.totalorder %s67, %s81
    %p83 = scmp.eq.s32.totalorder %s15, 0
    %p84 = por %p82, %p83
    %s85 = ssub.s32 %s9, %s16
    %p86 = scmp.eq.s32.totalorder %s85, 0
    %s88 = sadd.s32 %s87, 1
    %s89 = scalar_select %p86, %s87, %s88
    %p92 = pneg %p86
    %p93 = scmp.eq.s32.totalorder %s9, 1
    %p94 = por %p92, %p93
    %p95 = scmp.ne.s32.totalorder %s87, %s90
    %p96 = scmp.eq.s32.totalorder %s9, 0
    %p97 = por %p95, %p96
    %p98 = scmp.ne.s32.totalorder %s87, %s90
    %p99 = scmp.eq.s32.totalorder %s14, 1
    %p100 = por %p98, %p99
    %p101 = scmp.ne.s32.totalorder %s90, %s91
    %p102 = scmp.eq.s32.totalorder %s14, 0
    %p103 = por %p101, %p102
    %p104 = scmp.ne.s32.totalorder %s90, %s91
    %p105 = scmp.eq.s32.totalorder %s15, 1
    %p106 = por %p104, %p105
    %p108 = scmp.ne.s32.totalorder %s91, %s107
    %p109 = scmp.eq.s32.totalorder %s15, 0
    %p110 = por %p108, %p109
    %p111 = scmp.le.s32.totalorder 1, %s9
    %p112 = scmp.lt.s32.totalorder %s9, 3
    %p113 = pnand %p111, %p112
    %p114 = pneg %p113
    // Predicated region
    $region9: #{_lambda_.4} parent=5 // pred_check
      _
    $region10: #{_lambda_.4} parent=5 // pred_check_branch
      %116 = sbr.rel (%p113) target = $region12
    $region11: #{_lambda_.4} parent=5 // pred_region
      %s117 = ssub.s32 %s9, 1
      // Predicated region
      $region13: #{_lambda_.4} parent=11 // pred_check
        %p118 = pneg %p56
      $region14: #{_lambda_.4} parent=11 // pred_check_branch
        %120 = sbr.rel (%p118) target = $region16
      $region15: #{_lambda_.4} parent=11 // pred_region
        _
      $region16: #{_lambda_.4} parent=11 // pred_fallthru
        _
      // Predicated region
      $region17: #{_lambda_.4} parent=11 // pred_check
        %p121 = pneg %p77
      $region18: #{_lambda_.4} parent=11 // pred_check_branch
        %123 = sbr.rel (%p121) target = $region20
      $region19: #{_lambda_.4} parent=11 // pred_region
        _
      $region20: #{_lambda_.4} parent=11 // pred_fallthru
        _
    $region12: #{_lambda_.4} parent=5 // pred_fallthru
      _
    %p124 = scmp.lt.s32.totalorder %s9, 2
    // Predicated region
    $region21: #{_lambda_.4} parent=5 // pred_check
      %p125 = pneg %p124
    $region22: #{_lambda_.4} parent=5 // pred_check_branch
      %127 = sbr.rel (%p125) target = $region24
    $region23: #{_lambda_.4} parent=5 // pred_region
      // Predicated region
      $region25: #{_lambda_.4} parent=23 // pred_check
        %p128 = pneg %p29
      $region26: #{_lambda_.4} parent=23 // pred_check_branch
        %130 = sbr.rel (%p128) target = $region28
      $region27: #{_lambda_.4} parent=23 // pred_region
        %p131 = scmp.lt.s32.totalorder %s9, 1
        %s132 = scalar_select %p131, %s9, 1
        %s133 = smul.addr %s132, 8
        %s134 = scalar_lea.vmem %s0, %s133
      $region28: #{_lambda_.4} parent=23 // pred_fallthru
        _
    $region24: #{_lambda_.4} parent=5 // pred_fallthru
      _
    %p135 = scmp.le.s32.totalorder 1, %s9
    %p136 = scmp.lt.s32.totalorder %s9, 3
    %p137 = pnand %p135, %p136
    %p138 = pneg %p137
    // Predicated region
    $region29: #{_lambda_.4} parent=5 // pred_check
      _
    $region30: #{_lambda_.4} parent=5 // pred_check_branch
      %140 = sbr.rel (%p137) target = $region32
    $region31: #{_lambda_.4} parent=5 // pred_region
      %s141 = ssub.s32 %s9, 1
      %p142 = scmp.lt.s32.totalorder %s14, 1
      %s143 = scalar_select %p142, %s14, 1
      %s144 = smul.addr %s143, 8
      %s145 = scalar_lea.vmem %s0, %s144
      %p146 = pneg %p35
      %p147 = pneg %p32
      %p148 = pneg %p56
      %p149 = pneg %p53
      %p150 = pneg %p77
      %p151 = pneg %p74
      %p152 = pneg %p103
      %p153 = pneg %p100
      %p154 = scmp.lt.s32.totalorder %s14, 1
      %s155 = scalar_select %p154, %s14, 1
      %s156 = smul.addr %s155, 8
      %s157 = scalar_lea.vmem %s3, %s156
      %p158 = scmp.lt.s32.totalorder %s14, 1
      %s159 = scalar_select %p158, %s14, 1
      %s160 = smul.addr %s159, 8
      %s161 = scalar_lea.vmem %s0, %s160
      %p162 = scmp.lt.s32.totalorder %s14, 1
      %s163 = scalar_select %p162, %s14, 1
      %s164 = smul.addr %s163, 8
      %s165 = scalar_lea.vmem %s3, %s164
      %v166 = vld [vmem:[%s161] sm:$0xff]
      %vm167 = vcmask 261120
      %v168 = vsel %vm167, %v166, 0.0
      %169 = vadd.xlane.f32.xlu0 %v168
      %v170 = vpop.xlane.xlu0 %169
      %v171 = vrcp.pop 32.0
      %v172 = vmul.f32 %v170, %v171
      %v173 = vsub.f32 %v166, %v172
      %v174 = vmul.f32 %v173, %v173
      %v175 = vsel %vm167, %v174, 0.0
      %176 = vadd.xlane.f32.xlu0 %v175
      %v177 = vpop.xlane.xlu0 %176
      %v178 = vmul.f32 %v177, %v171
      %v179 = vadd.f32 %v178, 1e-12
      %v180 = vrsqrt.pop %v179
      %v181 = vmul.f32 %v173, %v180
      %v182 = vld [vmem:[%s1] sm:$0x1]
      %v184 = vlaneseq
      %v185 = vshrl.u32 %v184, 7
      %v186 = vsub.s32 0, %v185
      %v187 = vrot.slane %v182, %v186
      %v189 = vmul.f32 %v181, %v187
      %v190 = vld [vmem:[%s2] sm:$0x1]
      %v192 = vlaneseq
      %v193 = vshrl.u32 %v192, 7
      %v194 = vsub.s32 0, %v193
      %v195 = vrot.slane %v190, %v194
      %v197 = vadd.f32 %v189, %v195
      %198 = vst.msk [vmem:[%s165] sm:$0xff] %vm167, %v197
      %p199 = scmp.lt.s32.totalorder %s14, 1
      %s200 = scalar_select %p199, %s14, 1
      %s201 = smul.addr %s200, 8
      %s202 = scalar_lea.vmem %s3, %s201
      // Predicated region
      $region33: #{_lambda_.4} parent=31 // pred_check
        %p203 = pneg %p100
      $region34: #{_lambda_.4} parent=31 // pred_check_branch
        %205 = sbr.rel (%p203) target = $region36
      $region35: #{_lambda_.4} parent=31 // pred_region
        _
      $region36: #{_lambda_.4} parent=31 // pred_fallthru
        _
    $region32: #{_lambda_.4} parent=5 // pred_fallthru
      _
    %p206 = scmp.le.s32.totalorder 2, %s9
    // Predicated region
    $region37: #{_lambda_.4} parent=5 // pred_check
      %p207 = pneg %p206
    $region38: #{_lambda_.4} parent=5 // pred_check_branch
      %209 = sbr.rel (%p207) target = $region40
    $region39: #{_lambda_.4} parent=5 // pred_region
      %s210 = ssub.s32 %s9, 2
      // Predicated region
      $region41: #{_lambda_.4} parent=39 // pred_check
        %p211 = pneg %p106
      $region42: #{_lambda_.4} parent=39 // pred_check_branch
        %213 = sbr.rel (%p211) target = $region44
      $region43: #{_lambda_.4} parent=39 // pred_region
        %p214 = scmp.lt.s32.totalorder %s15, 1
        %s215 = scalar_select %p214, %s15, 1
        %s216 = smul.addr %s215, 8
        %s217 = scalar_lea.vmem %s3, %s216
      $region44: #{_lambda_.4} parent=39 // pred_fallthru
        _
    $region40: #{_lambda_.4} parent=5 // pred_fallthru
      _
  $region6: #{_lambda_.4} parent=0 // loop_footer
    %s13 = sadd.s32 1, %s9
  $region7: #{_lambda_.4} parent=0 // loop_footer_branch
    %8 = sbr.rel target = $region3
  $region8: #{_lambda_.4} parent=0 // loop_exit
    _

// kernel: _lambda_.7
$region0: #{_lambda_.7}
  #allocation0 [shape = 'u32[]', space=smem, size = 0x4, offset = 0x4, fixed_abs, tag = 'smem constant byte address 0x4 - core index']
  #allocation1 [shape = 'u32[144,128]{1,0:T(1,128)}', space=vmem, size = 0x12000, scoped, tag = 'internal scratch']
  %s0 = inlined_call_operand.vmem [shape: f32[2,32], index: 0, kind: input, shape index: {}]
  %s1 = inlined_call_operand.vmem [shape: bf16[32,128], index: 1, kind: input, shape index: {}]
  %s2 = inlined_call_operand.vmem [shape: f32[1,128], index: 2, kind: input, shape index: {}]
  %s3 = inlined_call_operand.vmem [shape: bf16[128,128], index: 3, kind: input, shape index: {}]
  %s4 = inlined_call_operand.vmem [shape: f32[1,128], index: 4, kind: input, shape index: {}]
  %s5 = inlined_call_operand.vmem [shape: bf16[128,128], index: 5, kind: input, shape index: {}]
  %s6 = inlined_call_operand.vmem [shape: f32[1,128], index: 6, kind: input, shape index: {}]
  %s7 = inlined_call_operand.vmem [shape: bf16[128,128], index: 7, kind: input, shape index: {}]
  %s8 = inlined_call_operand.vmem [shape: f32[1,128], index: 8, kind: input, shape index: {}]
  %s9 = inlined_call_operand.hbm [shape: f32[2,128], index: 9, kind: output, shape index: {}]
  %s10 = sld [smem:[#allocation0]]
  $region46: #{_lambda_.7} parent=0
    _
  %s12 = ssub.s32 1, %s10
  %s13 = scalar_select 0, %s12, %s10
  $region1: #{_lambda_.7} parent=0
    #allocation2 [shape = 'u8[1024]{0}', space=vmem, size = 0x400, scoped, tag = 'output window, operand 0, single buffered']
    #allocation3 [shape = 's32[1]{0}', space=sflag, size = 0x4, scoped, tag = 'scoped memory for _lambda_.7']
    %14 = vsyncpa [#allocation3], 0
    // Predicated region
    $region2: #{_lambda_.7} parent=1 // pred_check
      _
    $region3: #{_lambda_.7} parent=1 // pred_check_branch
      %16 = sbr.rel (0) target = $region5
    $region4: #{_lambda_.7} parent=1 // pred_region
      _
    $region5: #{_lambda_.7} parent=1 // pred_fallthru
      _
    // Predicated region
    $region6: #{_lambda_.7} parent=1 // pred_check
      _
    $region7: #{_lambda_.7} parent=1 // pred_check_branch
      %18 = sbr.rel (0) target = $region9
    $region8: #{_lambda_.7} parent=1 // pred_region
      _
    $region9: #{_lambda_.7} parent=1 // pred_fallthru
      _
    // Predicated region
    $region10: #{_lambda_.7} parent=1 // pred_check
      _
    $region11: #{_lambda_.7} parent=1 // pred_check_branch
      %20 = sbr.rel (0) target = $region13
    $region12: #{_lambda_.7} parent=1 // pred_region
      _
    $region13: #{_lambda_.7} parent=1 // pred_fallthru
      _
    // Predicated region
    $region14: #{_lambda_.7} parent=1 // pred_check
      _
    $region15: #{_lambda_.7} parent=1 // pred_check_branch
      %22 = sbr.rel (0) target = $region17
    $region16: #{_lambda_.7} parent=1 // pred_region
      _
    $region17: #{_lambda_.7} parent=1 // pred_fallthru
      _
    // Predicated region
    $region18: #{_lambda_.7} parent=1 // pred_check
      _
    $region19: #{_lambda_.7} parent=1 // pred_check_branch
      %24 = sbr.rel (0) target = $region21
    $region20: #{_lambda_.7} parent=1 // pred_region
      _
    $region21: #{_lambda_.7} parent=1 // pred_fallthru
      _
    // Predicated region
    $region22: #{_lambda_.7} parent=1 // pred_check
      _
    $region23: #{_lambda_.7} parent=1 // pred_check_branch
      %26 = sbr.rel (0) target = $region25
    $region24: #{_lambda_.7} parent=1 // pred_region
      _
    $region25: #{_lambda_.7} parent=1 // pred_fallthru
      _
    // Predicated region
    $region26: #{_lambda_.7} parent=1 // pred_check
      _
    $region27: #{_lambda_.7} parent=1 // pred_check_branch
      %28 = sbr.rel (0) target = $region29
    $region28: #{_lambda_.7} parent=1 // pred_region
      _
    $region29: #{_lambda_.7} parent=1 // pred_fallthru
      _
    // Predicated region
    $region30: #{_lambda_.7} parent=1 // pred_check
      _
    $region31: #{_lambda_.7} parent=1 // pred_check_branch
      %30 = sbr.rel (0) target = $region33
    $region32: #{_lambda_.7} parent=1 // pred_region
      _
    $region33: #{_lambda_.7} parent=1 // pred_fallthru
      _
    // Predicated region
    $region34: #{_lambda_.7} parent=1 // pred_check
      _
    $region35: #{_lambda_.7} parent=1 // pred_check_branch
      %32 = sbr.rel (0) target = $region37
    $region36: #{_lambda_.7} parent=1 // pred_region
      _
    $region37: #{_lambda_.7} parent=1 // pred_fallthru
      _
    %v34 = vld [vmem:[%s0] sm:$0x3]
    %v35 = vpack.c.bf16 %v34, %v34
    %v36 = vld [vmem:[%s1] sm:$0xf]
    %v37 = vld [vmem:[%s1 + $0x4] sm:$0xf]
    %v38 = vld [vmem:[%s1 + $0x8] sm:$0xf]
    %v39 = vld [vmem:[%s1 + $0xc] sm:$0xf]
    %v40 = vld [vmem:[%s2] sm:$0x1]
    %v42 = vlaneseq
    %v43 = vshrl.u32 %v42, 7
    %v44 = vsub.s32 0, %v43
    %v45 = vrot.slane %v40, %v44
    %v51 = vunpack.c.l.b16 %v36
    %v52 = vunpack.c.l.b16 %v37
    %v53 = vunpack.c.l.b16 %v38
    %v54 = vunpack.c.l.b16 %v39
    %v55 = vpack.c.b16 %v52, %v51
    %v56 = vpack.c.b16 %v54, %v53
    %vm59 = vcmask 261120
    %v61 = vsel %vm59, %v35, 0
    %63 = vmatprep.subr.bf16.mxu0 0
    %64 = vmatpush1.bf16.msra.mxu0 %v55
    %65 = vmatprep.subr.bf16.mxu0 0
    %66 = vmatpush1.bf16.msra.mxu0 %v56
    %67 = vmatprep.subr.bf16.mxu0 0
    %68 = vmatpush1.bf16.msra.mxu0 0
    %69 = vmatprep.subr.bf16.mxu0 0
    %70 = vmatpush1.bf16.msra.mxu0 0
    %71 = vmatprep.subr.bf16.mxu0 0
    %72 = vmatpush1.bf16.msra.mxu0 0
    %73 = vmatprep.subr.bf16.mxu0 0
    %74 = vmatpush1.bf16.msra.mxu0 0
    %75 = vmatprep.subr.bf16.mxu0 0
    %76 = vmatpush1.bf16.msra.mxu0 0
    %77 = vmatprep.subr.bf16.mxu0 0
    %78 = vmatpush1.bf16.msra.mxu0 0
    %79 = vmatprep.subr.bf16.mxu0 0
    %80 = vmatpush1.bf16.msra.mxu0 0
    %81 = vmatprep.subr.bf16.mxu0 0
    %82 = vmatpush1.bf16.msra.mxu0 0
    %83 = vmatprep.subr.bf16.mxu0 0
    %84 = vmatpush1.bf16.msra.mxu0 0
    %85 = vmatprep.subr.bf16.mxu0 0
    %86 = vmatpush1.bf16.msra.mxu0 0
    %87 = vmatprep.subr.bf16.mxu0 0
    %88 = vmatpush1.bf16.msra.mxu0 0
    %89 = vmatprep.subr.bf16.mxu0 0
    %90 = vmatpush1.bf16.msra.mxu0 0
    %91 = vmatprep.subr.bf16.mxu0 0
    %92 = vmatpush1.bf16.msra.mxu0 0
    %93 = vmatprep.subr.bf16.mxu0 0
    %94 = vmatpush1.bf16.msra.mxu0 0
    %95 = vmatprep.mubr.bf16.mxu0 0
    %96 = vmatmul.mubr.bf16.gmra.mrb[0].mxu0 %v61
    %v97 = vpop.f32.mrb[0].mxu0
    %v98 = vadd.f32 %v45, %v97
    %v99 = vpop.f32.mrb[0].mxu0
    %v100 = vpop.f32.mrb[0].mxu0
    %v101 = vpop.f32.mrb[0].mxu0
    %102 = vdwg.mxu0
    %v103 = vmax.f32 %v98, 0.0
    %v104 = vpack.c.bf16 %v103, %v103
    %v105 = vld [vmem:[%s3] sm:$0xf]
    %v106 = vld [vmem:[%s3 + $0x4] sm:$0xf]
    %v107 = vld [vmem:[%s3 + $0x8] sm:$0xf]
    %v108 = vld [vmem:[%s3 + $0xc] sm:$0xf]
    %v109 = vld [vmem:[%s3 + $0x10] sm:$0xf]
    %v110 = vld [vmem:[%s3 + $0x14] sm:$0xf]
    %v111 = vld [vmem:[%s3 + $0x18] sm:$0xf]
    %v112 = vld [vmem:[%s3 + $0x1c] sm:$0xf]
    %v113 = vld [vmem:[%s3 + $0x20] sm:$0xf]
    %v114 = vld [vmem:[%s3 + $0x24] sm:$0xf]
    %v115 = vld [vmem:[%s3 + $0x28] sm:$0xf]
    %v116 = vld [vmem:[%s3 + $0x2c] sm:$0xf]
    %v117 = vld [vmem:[%s3 + $0x30] sm:$0xf]
    %v118 = vld [vmem:[%s3 + $0x34] sm:$0xf]
    %v119 = vld [vmem:[%s3 + $0x38] sm:$0xf]
    %v120 = vld [vmem:[%s3 + $0x3c] sm:$0xf]
    %v121 = vld [vmem:[%s4] sm:$0x1]
    %v123 = vlaneseq
    %v124 = vshrl.u32 %v123, 7
    %v125 = vsub.s32 0, %v124
    %v126 = vrot.slane %v121, %v125
    %v144 = vunpack.c.l.b16 %v105
    %v145 = vunpack.c.l.b16 %v106
    %v146 = vunpack.c.l.b16 %v107
    %v147 = vunpack.c.l.b16 %v108
    %v148 = vunpack.c.l.b16 %v109
    %v149 = vunpack.c.l.b16 %v110
    %v150 = vunpack.c.l.b16 %v111
    %v151 = vunpack.c.l.b16 %v112
    %v152 = vunpack.c.l.b16 %v113
    %v153 = vunpack.c.l.b16 %v114
    %v154 = vunpack.c.l.b16 %v115
    %v155 = vunpack.c.l.b16 %v116
    %v156 = vunpack.c.l.b16 %v117
    %v157 = vunpack.c.l.b16 %v118
    %v158 = vunpack.c.l.b16 %v119
    %v159 = vunpack.c.l.b16 %v120
    %v160 = vpack.c.b16 %v145, %v144
    %v161 = vpack.c.b16 %v147, %v146
    %v162 = vpack.c.b16 %v149, %v148
    %v163 = vpack.c.b16 %v151, %v150
    %v164 = vpack.c.b16 %v153, %v152
    %v165 = vpack.c.b16 %v155, %v154
    %v166 = vpack.c.b16 %v157, %v156
    %v167 = vpack.c.b16 %v159, %v158
    %176 = vmatprep.subr.bf16.mxu0 0
    %177 = vmatpush1.bf16.msra.mxu0 %v160
    %178 = vmatprep.subr.bf16.mxu0 0
    %179 = vmatpush1.bf16.msra.mxu0 %v161
    %180 = vmatprep.subr.bf16.mxu0 0
    %181 = vmatpush1.bf16.msra.mxu0 %v162
    %182 = vmatprep.subr.bf16.mxu0 0
    %183 = vmatpush1.bf16.msra.mxu0 %v163
    %184 = vmatprep.subr.bf16.mxu0 0
    %185 = vmatpush1.bf16.msra.mxu0 %v164
    %186 = vmatprep.subr.bf16.mxu0 0
    %187 = vmatpush1.bf16.msra.mxu0 %v165
    %188 = vmatprep.subr.bf16.mxu0 0
    %189 = vmatpush1.bf16.msra.mxu0 %v166
    %190 = vmatprep.subr.bf16.mxu0 0
    %191 = vmatpush1.bf16.msra.mxu0 %v167
    %192 = vmatprep.subr.bf16.mxu0 0
    %193 = vmatpush1.bf16.msra.mxu0 0
    %194 = vmatprep.subr.bf16.mxu0 0
    %195 = vmatpush1.bf16.msra.mxu0 0
    %196 = vmatprep.subr.bf16.mxu0 0
    %197 = vmatpush1.bf16.msra.mxu0 0
    %198 = vmatprep.subr.bf16.mxu0 0
    %199 = vmatpush1.bf16.msra.mxu0 0
    %200 = vmatprep.subr.bf16.mxu0 0
    %201 = vmatpush1.bf16.msra.mxu0 0
    %202 = vmatprep.subr.bf16.mxu0 0
    %203 = vmatpush1.bf16.msra.mxu0 0
    %204 = vmatprep.subr.bf16.mxu0 0
    %205 = vmatpush1.bf16.msra.mxu0 0
    %206 = vmatprep.subr.bf16.mxu0 0
    %207 = vmatpush1.bf16.msra.mxu0 0
    %208 = vmatprep.mubr.bf16.mxu0 0
    %209 = vmatmul.mubr.bf16.gmra.mrb[0].mxu0 %v104
    %v210 = vpop.f32.mrb[0].mxu0
    %v211 = vadd.f32 %v126, %v210
    %v212 = vpop.f32.mrb[0].mxu0
    %v213 = vpop.f32.mrb[0].mxu0
    %v214 = vpop.f32.mrb[0].mxu0
    %215 = vdwg.mxu0
    %v216 = vpack.c.bf16 %v211, %v211
    %v217 = vld [vmem:[%s5] sm:$0xf]
    %v218 = vld [vmem:[%s5 + $0x4] sm:$0xf]
    %v219 = vld [vmem:[%s5 + $0x8] sm:$0xf]
    %v220 = vld [vmem:[%s5 + $0xc] sm:$0xf]
    %v221 = vld [vmem:[%s5 + $0x10] sm:$0xf]
    %v222 = vld [vmem:[%s5 + $0x14] sm:$0xf]
    %v223 = vld [vmem:[%s5 + $0x18] sm:$0xf]
    %v224 = vld [vmem:[%s5 + $0x1c] sm:$0xf]
    %v225 = vld [vmem:[%s5 + $0x20] sm:$0xf]
    %v226 = vld [vmem:[%s5 + $0x24] sm:$0xf]
    %v227 = vld [vmem:[%s5 + $0x28] sm:$0xf]
    %v228 = vld [vmem:[%s5 + $0x2c] sm:$0xf]
    %v229 = vld [vmem:[%s5 + $0x30] sm:$0xf]
    %v230 = vld [vmem:[%s5 + $0x34] sm:$0xf]
    %v231 = vld [vmem:[%s5 + $0x38] sm:$0xf]
    %v232 = vld [vmem:[%s5 + $0x3c] sm:$0xf]
    %v233 = vld [vmem:[%s6] sm:$0x1]
    %v235 = vlaneseq
    %v236 = vshrl.u32 %v235, 7
    %v237 = vsub.s32 0, %v236
    %v238 = vrot.slane %v233, %v237
    %v256 = vunpack.c.l.b16 %v217
    %v257 = vunpack.c.l.b16 %v218
    %v258 = vunpack.c.l.b16 %v219
    %v259 = vunpack.c.l.b16 %v220
    %v260 = vunpack.c.l.b16 %v221
    %v261 = vunpack.c.l.b16 %v222
    %v262 = vunpack.c.l.b16 %v223
    %v263 = vunpack.c.l.b16 %v224
    %v264 = vunpack.c.l.b16 %v225
    %v265 = vunpack.c.l.b16 %v226
    %v266 = vunpack.c.l.b16 %v227
    %v267 = vunpack.c.l.b16 %v228
    %v268 = vunpack.c.l.b16 %v229
    %v269 = vunpack.c.l.b16 %v230
    %v270 = vunpack.c.l.b16 %v231
    %v271 = vunpack.c.l.b16 %v232
    %v272 = vpack.c.b16 %v257, %v256
    %v273 = vpack.c.b16 %v259, %v258
    %v274 = vpack.c.b16 %v261, %v260
    %v275 = vpack.c.b16 %v263, %v262
    %v276 = vpack.c.b16 %v265, %v264
    %v277 = vpack.c.b16 %v267, %v266
    %v278 = vpack.c.b16 %v269, %v268
    %v279 = vpack.c.b16 %v271, %v270
    %288 = vmatprep.subr.bf16.mxu0 0
    %289 = vmatpush1.bf16.msra.mxu0 %v272
    %290 = vmatprep.subr.bf16.mxu0 0
    %291 = vmatpush1.bf16.msra.mxu0 %v273
    %292 = vmatprep.subr.bf16.mxu0 0
    %293 = vmatpush1.bf16.msra.mxu0 %v274
    %294 = vmatprep.subr.bf16.mxu0 0
    %295 = vmatpush1.bf16.msra.mxu0 %v275
    %296 = vmatprep.subr.bf16.mxu0 0
    %297 = vmatpush1.bf16.msra.mxu0 %v276
    %298 = vmatprep.subr.bf16.mxu0 0
    %299 = vmatpush1.bf16.msra.mxu0 %v277
    %300 = vmatprep.subr.bf16.mxu0 0
    %301 = vmatpush1.bf16.msra.mxu0 %v278
    %302 = vmatprep.subr.bf16.mxu0 0
    %303 = vmatpush1.bf16.msra.mxu0 %v279
    %304 = vmatprep.subr.bf16.mxu0 0
    %305 = vmatpush1.bf16.msra.mxu0 0
    %306 = vmatprep.subr.bf16.mxu0 0
    %307 = vmatpush1.bf16.msra.mxu0 0
    %308 = vmatprep.subr.bf16.mxu0 0
    %309 = vmatpush1.bf16.msra.mxu0 0
    %310 = vmatprep.subr.bf16.mxu0 0
    %311 = vmatpush1.bf16.msra.mxu0 0
    %312 = vmatprep.subr.bf16.mxu0 0
    %313 = vmatpush1.bf16.msra.mxu0 0
    %314 = vmatprep.subr.bf16.mxu0 0
    %315 = vmatpush1.bf16.msra.mxu0 0
    %316 = vmatprep.subr.bf16.mxu0 0
    %317 = vmatpush1.bf16.msra.mxu0 0
    %318 = vmatprep.subr.bf16.mxu0 0
    %319 = vmatpush1.bf16.msra.mxu0 0
    %320 = vmatprep.mubr.bf16.mxu0 0
    %321 = vmatmul.mubr.bf16.gmra.mrb[0].mxu0 %v216
    %v322 = vpop.f32.mrb[0].mxu0
    %v323 = vadd.f32 %v238, %v322
    %v324 = vpop.f32.mrb[0].mxu0
    %v325 = vpop.f32.mrb[0].mxu0
    %v326 = vpop.f32.mrb[0].mxu0
    %327 = vdwg.mxu0
    %v328 = vmax.f32 %v323, 0.0
    %v329 = vpack.c.bf16 %v328, %v328
    %v330 = vld [vmem:[%s7] sm:$0xf]
    %v331 = vld [vmem:[%s7 + $0x4] sm:$0xf]
    %v332 = vld [vmem:[%s7 + $0x8] sm:$0xf]
    %v333 = vld [vmem:[%s7 + $0xc] sm:$0xf]
    %v334 = vld [vmem:[%s7 + $0x10] sm:$0xf]
    %v335 = vld [vmem:[%s7 + $0x14] sm:$0xf]
    %v336 = vld [vmem:[%s7 + $0x18] sm:$0xf]
    %v337 = vld [vmem:[%s7 + $0x1c] sm:$0xf]
    %v338 = vld [vmem:[%s7 + $0x20] sm:$0xf]
    %v339 = vld [vmem:[%s7 + $0x24] sm:$0xf]
    %v340 = vld [vmem:[%s7 + $0x28] sm:$0xf]
    %v341 = vld [vmem:[%s7 + $0x2c] sm:$0xf]
    %v342 = vld [vmem:[%s7 + $0x30] sm:$0xf]
    %v343 = vld [vmem:[%s7 + $0x34] sm:$0xf]
    %v344 = vld [vmem:[%s7 + $0x38] sm:$0xf]
    %v345 = vld [vmem:[%s7 + $0x3c] sm:$0xf]
    %v346 = vld [vmem:[%s8] sm:$0x1]
    %v348 = vlaneseq
    %v349 = vshrl.u32 %v348, 7
    %v350 = vsub.s32 0, %v349
    %v351 = vrot.slane %v346, %v350
    %v369 = vunpack.c.l.b16 %v330
    %v370 = vunpack.c.l.b16 %v331
    %v371 = vunpack.c.l.b16 %v332
    %v372 = vunpack.c.l.b16 %v333
    %v373 = vunpack.c.l.b16 %v334
    %v374 = vunpack.c.l.b16 %v335
    %v375 = vunpack.c.l.b16 %v336
    %v376 = vunpack.c.l.b16 %v337
    %v377 = vunpack.c.l.b16 %v338
    %v378 = vunpack.c.l.b16 %v339
    %v379 = vunpack.c.l.b16 %v340
    %v380 = vunpack.c.l.b16 %v341
    %v381 = vunpack.c.l.b16 %v342
    %v382 = vunpack.c.l.b16 %v343
    %v383 = vunpack.c.l.b16 %v344
    %v384 = vunpack.c.l.b16 %v345
    %v385 = vpack.c.b16 %v370, %v369
    %v386 = vpack.c.b16 %v372, %v371
    %v387 = vpack.c.b16 %v374, %v373
    %v388 = vpack.c.b16 %v376, %v375
    %v389 = vpack.c.b16 %v378, %v377
    %v390 = vpack.c.b16 %v380, %v379
    %v391 = vpack.c.b16 %v382, %v381
    %v392 = vpack.c.b16 %v384, %v383
    %401 = vmatprep.subr.bf16.mxu0 0
    %402 = vmatpush1.bf16.msra.mxu0 %v385
    %403 = vmatprep.subr.bf16.mxu0 0
    %404 = vmatpush1.bf16.msra.mxu0 %v386
    %405 = vmatprep.subr.bf16.mxu0 0
    %406 = vmatpush1.bf16.msra.mxu0 %v387
    %407 = vmatprep.subr.bf16.mxu0 0
    %408 = vmatpush1.bf16.msra.mxu0 %v388
    %409 = vmatprep.subr.bf16.mxu0 0
    %410 = vmatpush1.bf16.msra.mxu0 %v389
    %411 = vmatprep.subr.bf16.mxu0 0
    %412 = vmatpush1.bf16.msra.mxu0 %v390
    %413 = vmatprep.subr.bf16.mxu0 0
    %414 = vmatpush1.bf16.msra.mxu0 %v391
    %415 = vmatprep.subr.bf16.mxu0 0
    %416 = vmatpush1.bf16.msra.mxu0 %v392
    %417 = vmatprep.subr.bf16.mxu0 0
    %418 = vmatpush1.bf16.msra.mxu0 0
    %419 = vmatprep.subr.bf16.mxu0 0
    %420 = vmatpush1.bf16.msra.mxu0 0
    %421 = vmatprep.subr.bf16.mxu0 0
    %422 = vmatpush1.bf16.msra.mxu0 0
    %423 = vmatprep.subr.bf16.mxu0 0
    %424 = vmatpush1.bf16.msra.mxu0 0
    %425 = vmatprep.subr.bf16.mxu0 0
    %426 = vmatpush1.bf16.msra.mxu0 0
    %427 = vmatprep.subr.bf16.mxu0 0
    %428 = vmatpush1.bf16.msra.mxu0 0
    %429 = vmatprep.subr.bf16.mxu0 0
    %430 = vmatpush1.bf16.msra.mxu0 0
    %431 = vmatprep.subr.bf16.mxu0 0
    %432 = vmatpush1.bf16.msra.mxu0 0
    %433 = vmatprep.mubr.bf16.mxu0 0
    %434 = vmatmul.mubr.bf16.gmra.mrb[0].mxu0 %v329
    %v435 = vpop.f32.mrb[0].mxu0
    %v436 = vadd.f32 %v351, %v435
    %v437 = vpop.f32.mrb[0].mxu0
    %v438 = vpop.f32.mrb[0].mxu0
    %v439 = vpop.f32.mrb[0].mxu0
    %440 = vdwg.mxu0
    %v441 = vmax.f32 %v436, 0.0
    %vm442 = vcmp.ne.f32.partialorder %v436, %v436
    %v443 = vadd.f32 %v436, 0.0
    %v444 = vand.u32 2147483647, %v436
    %v445 = vsub.f32 0.0, %v444
    %v446 = vmul.f32 %v445, 1.442695
    %v447 = vpow.pop %v446
    %v448 = vadd.f32 %v447, 1.0
    %v449 = vlog2.pop %v448
    %v450 = vmul.f32 %v449, 0.6931472
    %v451 = vmul.f32 -0.5, %v447
    %v452 = vadd.f32 %v451, 1.0
    %v453 = vmul.f32 %v452, %v447
    %v454 = vand.u32 2147483647, %v447
    %vm455 = vcmp.lt.f32.partialorder %v454, 0.0004427343
    %v456 = vsel %vm455, %v453, %v450
    %v457 = vadd.f32 %v441, %v456
    %v458 = vsel %vm442, %v443, %v457
    %459 = vst [vmem:[#allocation2] sm:$0x3] %v458
    // Predicated region
    $region38: #{_lambda_.7} parent=1 // pred_check
      _
    $region39: #{_lambda_.7} parent=1 // pred_check_branch
      %461 = sbr.rel (0) target = $region41
    $region40: #{_lambda_.7} parent=1 // pred_region
      %s463 = ssub.s32 32, 32
      %464 = vsyncadd [#allocation3], %s463
      %s466 = sshll.u32 [#allocation2], 4
      %s467 = int_to_ptr.vmem [resolvable:$true] %s466
      %469 = dma.vmem_to_hbm [thread:$0]  %s467, 32, %s9, [#allocation3]
    $region41: #{_lambda_.7} parent=1 // pred_fallthru
      _
    // Predicated region
    $region42: #{_lambda_.7} parent=1 // pred_check
      _
    $region43: #{_lambda_.7} parent=1 // pred_check_branch
      %471 = sbr.rel (0) target = $region45
    $region44: #{_lambda_.7} parent=1 // pred_region
      %472 = dma.done [#allocation3], 32
    $region45: #{_lambda_.7} parent=1 // pred_fallthru
      _
    %473 = vsyncpa [#allocation3], 1

// kernel: _lambda_.5
$region0: #{_lambda_.5}
  #allocation0 [shape = 'u32[]', space=smem, size = 0x4, offset = 0x4, fixed_abs, tag = 'smem constant byte address 0x4 - core index']
  #allocation1 [shape = 'u32[144,128]{1,0:T(1,128)}', space=vmem, size = 0x12000, scoped, tag = 'internal scratch']
  %s0 = inlined_call_operand.vmem [shape: f32[2,8,32], index: 0, kind: input, shape index: {}]
  %s1 = inlined_call_operand.vmem [shape: f32[2,1,8], index: 1, kind: input, shape index: {}]
  %s2 = inlined_call_operand.vmem [shape: bf16[32,96], index: 2, kind: input, shape index: {}]
  %s3 = inlined_call_operand.vmem [shape: f32[1,96], index: 3, kind: input, shape index: {}]
  %s4 = inlined_call_operand.vmem [shape: bf16[32,32], index: 4, kind: input, shape index: {}]
  %s5 = inlined_call_operand.vmem [shape: f32[1,32], index: 5, kind: input, shape index: {}]
  %s6 = inlined_call_operand.vmem [shape: f32[1,32], index: 6, kind: input, shape index: {}]
  %s7 = inlined_call_operand.vmem [shape: f32[1,32], index: 7, kind: input, shape index: {}]
  %s8 = inlined_call_operand.vmem [shape: bf16[32,64], index: 8, kind: input, shape index: {}]
  %s9 = inlined_call_operand.vmem [shape: f32[1,64], index: 9, kind: input, shape index: {}]
  %s10 = inlined_call_operand.vmem [shape: bf16[64,32], index: 10, kind: input, shape index: {}]
  %s11 = inlined_call_operand.vmem [shape: f32[1,32], index: 11, kind: input, shape index: {}]
  %s12 = inlined_call_operand.vmem [shape: f32[1,32], index: 12, kind: input, shape index: {}]
  %s13 = inlined_call_operand.vmem [shape: f32[1,32], index: 13, kind: input, shape index: {}]
  %s14 = inlined_call_operand.vmem [shape: f32[2,8,32], index: 14, kind: output, shape index: {}]
  %s15 = sld [smem:[#allocation0]]
  $region89: #{_lambda_.5} parent=0
    _
  %s17 = ssub.s32 1, %s15
  %s18 = scalar_select 0, %s17, %s15
  loop: start=0, step=1, limit=4
  $region2: #{_lambda_.5} parent=0 // loop_pre_header
    _
  $region3: #{_lambda_.5} parent=0 // loop_header
    %s20 = sphi 0, %s24
    %p21 = scmp.ge.s32.totalorder %s20, 4
    %s30 = sphi 0, %s32
    %s33 = sphi 0, %s30
    %s34 = sphi 0, %s33
    %s50 = sphi 0, %s34
    %s56 = sphi 0, %s58
    %s59 = sphi 0, %s56
    %s60 = sphi 0, %s59
    %s76 = sphi 0, %s60
    %s80 = sphi 0, %s80
    %s82 = sphi 0, %s80
    %s83 = sphi 0, %s82
    %s97 = sphi 0, %s83
    %s101 = sphi 0, %s101
    %s103 = sphi 0, %s101
    %s104 = sphi 0, %s103
    %s118 = sphi 0, %s104
    %s122 = sphi 0, %s122
    %s124 = sphi 0, %s122
    %s125 = sphi 0, %s124
    %s139 = sphi 0, %s125
    %s143 = sphi 0, %s143
    %s145 = sphi 0, %s143
    %s146 = sphi 0, %s145
    %s160 = sphi 0, %s146
    %s164 = sphi 0, %s164
    %s166 = sphi 0, %s164
    %s167 = sphi 0, %s166
    %s181 = sphi 0, %s167
    %s185 = sphi 0, %s185
    %s187 = sphi 0, %s185
    %s188 = sphi 0, %s187
    %s202 = sphi 0, %s188
    %s206 = sphi 0, %s206
    %s208 = sphi 0, %s206
    %s209 = sphi 0, %s208
    %s223 = sphi 0, %s209
    %s227 = sphi 0, %s227
    %s229 = sphi 0, %s227
    %s230 = sphi 0, %s229
    %s244 = sphi 0, %s230
    %s248 = sphi 0, %s248
    %s250 = sphi 0, %s248
    %s251 = sphi 0, %s250
    %s265 = sphi 0, %s251
    %s269 = sphi 0, %s269
    %s271 = sphi 0, %s269
    %s272 = sphi 0, %s271
    %s286 = sphi 0, %s272
    %s290 = sphi 0, %s290
    %s292 = sphi 0, %s290
    %s293 = sphi 0, %s292
    %s307 = sphi 0, %s293
    %s311 = sphi 0, %s311
    %s313 = sphi 0, %s311
    %s314 = sphi 0, %s313
    %s328 = sphi 0, %s314
    %s334 = sphi 0, %s336
    %s337 = sphi 0, %s334
    %s338 = sphi 0, %s337
    %s354 = sphi 0, %s338
  $region4: #{_lambda_.5} parent=0 // loop_header_branch
    %23 = sbr.rel (%p21) target = $region8
  $region5: #{_lambda_.5} parent=0 // loop_body
    %s25 = ssub.s32 %s20, 1
    %s26 = ssub.s32 %s20, 2
    %s27 = sadd.s32 %s20, 1
    %s28 = ssub.s32 %s20, %s27
    %p29 = scmp.eq.s32.totalorder %s28, 0
    %s31 = sadd.s32 %s30, 1
    %s32 = scalar_select %p29, %s30, %s31
    %p35 = pneg %p29
    %p36 = scmp.eq.s32.totalorder %s20, 1
    %p37 = por %p35, %p36
    %p38 = scmp.ne.s32.totalorder %s30, %s33
    %p39 = scmp.eq.s32.totalorder %s20, 0
    %p40 = por %p38, %p39
    %p41 = scmp.ne.s32.totalorder %s30, %s33
    %p42 = scmp.eq.s32.totalorder %s25, 1
    %p43 = por %p41, %p42
    %p44 = scmp.ne.s32.totalorder %s33, %s34
    %p45 = scmp.eq.s32.totalorder %s25, 0
    %p46 = por %p44, %p45
    %p47 = scmp.ne.s32.totalorder %s33, %s34
    %p48 = scmp.eq.s32.totalorder %s26, 1
    %p49 = por %p47, %p48
    %p51 = scmp.ne.s32.totalorder %s34, %s50
    %p52 = scmp.eq.s32.totalorder %s26, 0
    %p53 = por %p51, %p52
    %s54 = ssub.s32 %s20, %s27
    %p55 = scmp.eq.s32.totalorder %s54, 0
    %s57 = sadd.s32 %s56, 1
    %s58 = scalar_select %p55, %s56, %s57
    %p61 = pneg %p55
    %p62 = scmp.eq.s32.totalorder %s20, 1
    %p63 = por %p61, %p62
    %p64 = scmp.ne.s32.totalorder %s56, %s59
    %p65 = scmp.eq.s32.totalorder %s20, 0
    %p66 = por %p64, %p65
    %p67 = scmp.ne.s32.totalorder %s56, %s59
    %p68 = scmp.eq.s32.totalorder %s25, 1
    %p69 = por %p67, %p68
    %p70 = scmp.ne.s32.totalorder %s59, %s60
    %p71 = scmp.eq.s32.totalorder %s25, 0
    %p72 = por %p70, %p71
    %p73 = scmp.ne.s32.totalorder %s59, %s60
    %p74 = scmp.eq.s32.totalorder %s26, 1
    %p75 = por %p73, %p74
    %p77 = scmp.ne.s32.totalorder %s60, %s76
    %p78 = scmp.eq.s32.totalorder %s26, 0
    %p79 = por %p77, %p78
    %s81 = sadd.s32 %s80, 1
    %p84 = scmp.eq.s32.totalorder %s20, 1
    %p85 = scmp.ne.s32.totalorder %s80, %s82
    %p86 = scmp.eq.s32.totalorder %s20, 0
    %p87 = por %p85, %p86
    %p88 = scmp.ne.s32.totalorder %s80, %s82
    %p89 = scmp.eq.s32.totalorder %s25, 1
    %p90 = por %p88, %p89
    %p91 = scmp.ne.s32.totalorder %s82, %s83
    %p92 = scmp.eq.s32.totalorder %s25, 0
    %p93 = por %p91, %p92
    %p94 = scmp.ne.s32.totalorder %s82, %s83
    %p95 = scmp.eq.s32.totalorder %s26, 1
    %p96 = por %p94, %p95
    %p98 = scmp.ne.s32.totalorder %s83, %s97
    %p99 = scmp.eq.s32.totalorder %s26, 0
    %p100 = por %p98, %p99
    %s102 = sadd.s32 %s101, 1
    %p105 = scmp.eq.s32.totalorder %s20, 1
    %p106 = scmp.ne.s32.totalorder %s101, %s103
    %p107 = scmp.eq.s32.totalorder %s20, 0
    %p108 = por %p106, %p107
    %p109 = scmp.ne.s32.totalorder %s101, %s103
    %p110 = scmp.eq.s32.totalorder %s25, 1
    %p111 = por %p109, %p110
    %p112 = scmp.ne.s32.totalorder %s103, %s104
    %p113 = scmp.eq.s32.totalorder %s25, 0
    %p114 = por %p112, %p113
    %p115 = scmp.ne.s32.totalorder %s103, %s104
    %p116 = scmp.eq.s32.totalorder %s26, 1
    %p117 = por %p115, %p116
    %p119 = scmp.ne.s32.totalorder %s104, %s118
    %p120 = scmp.eq.s32.totalorder %s26, 0
    %p121 = por %p119, %p120
    %s123 = sadd.s32 %s122, 1
    %p126 = scmp.eq.s32.totalorder %s20, 1
    %p127 = scmp.ne.s32.totalorder %s122, %s124
    %p128 = scmp.eq.s32.totalorder %s20, 0
    %p129 = por %p127, %p128
    %p130 = scmp.ne.s32.totalorder %s122, %s124
    %p131 = scmp.eq.s32.totalorder %s25, 1
    %p132 = por %p130, %p131
    %p133 = scmp.ne.s32.totalorder %s124, %s125
    %p134 = scmp.eq.s32.totalorder %s25, 0
    %p135 = por %p133, %p134
    %p136 = scmp.ne.s32.totalorder %s124, %s125
    %p137 = scmp.eq.s32.totalorder %s26, 1
    %p138 = por %p136, %p137
    %p140 = scmp.ne.s32.totalorder %s125, %s139
    %p141 = scmp.eq.s32.totalorder %s26, 0
    %p142 = por %p140, %p141
    %s144 = sadd.s32 %s143, 1
    %p147 = scmp.eq.s32.totalorder %s20, 1
    %p148 = scmp.ne.s32.totalorder %s143, %s145
    %p149 = scmp.eq.s32.totalorder %s20, 0
    %p150 = por %p148, %p149
    %p151 = scmp.ne.s32.totalorder %s143, %s145
    %p152 = scmp.eq.s32.totalorder %s25, 1
    %p153 = por %p151, %p152
    %p154 = scmp.ne.s32.totalorder %s145, %s146
    %p155 = scmp.eq.s32.totalorder %s25, 0
    %p156 = por %p154, %p155
    %p157 = scmp.ne.s32.totalorder %s145, %s146
    %p158 = scmp.eq.s32.totalorder %s26, 1
    %p159 = por %p157, %p158
    %p161 = scmp.ne.s32.totalorder %s146, %s160
    %p162 = scmp.eq.s32.totalorder %s26, 0
    %p163 = por %p161, %p162
    %s165 = sadd.s32 %s164, 1
    %p168 = scmp.eq.s32.totalorder %s20, 1
    %p169 = scmp.ne.s32.totalorder %s164, %s166
    %p170 = scmp.eq.s32.totalorder %s20, 0
    %p171 = por %p169, %p170
    %p172 = scmp.ne.s32.totalorder %s164, %s166
    %p173 = scmp.eq.s32.totalorder %s25, 1
    %p174 = por %p172, %p173
    %p175 = scmp.ne.s32.totalorder %s166, %s167
    %p176 = scmp.eq.s32.totalorder %s25, 0
    %p177 = por %p175, %p176
    %p178 = scmp.ne.s32.totalorder %s166, %s167
    %p179 = scmp.eq.s32.totalorder %s26, 1
    %p180 = por %p178, %p179
    %p182 = scmp.ne.s32.totalorder %s167, %s181
    %p183 = scmp.eq.s32.totalorder %s26, 0
    %p184 = por %p182, %p183
    %s186 = sadd.s32 %s185, 1
    %p189 = scmp.eq.s32.totalorder %s20, 1
    %p190 = scmp.ne.s32.totalorder %s185, %s187
    %p191 = scmp.eq.s32.totalorder %s20, 0
    %p192 = por %p190, %p191
    %p193 = scmp.ne.s32.totalorder %s185, %s187
    %p194 = scmp.eq.s32.totalorder %s25, 1
    %p195 = por %p193, %p194
    %p196 = scmp.ne.s32.totalorder %s187, %s188
    %p197 = scmp.eq.s32.totalorder %s25, 0
    %p198 = por %p196, %p197
    %p199 = scmp.ne.s32.totalorder %s187, %s188
    %p200 = scmp.eq.s32.totalorder %s26, 1
    %p201 = por %p199, %p200
    %p203 = scmp.ne.s32.totalorder %s188, %s202
    %p204 = scmp.eq.s32.totalorder %s26, 0
    %p205 = por %p203, %p204
    %s207 = sadd.s32 %s206, 1
    %p210 = scmp.eq.s32.totalorder %s20, 1
    %p211 = scmp.ne.s32.totalorder %s206, %s208
    %p212 = scmp.eq.s32.totalorder %s20, 0
    %p213 = por %p211, %p212
    %p214 = scmp.ne.s32.totalorder %s206, %s208
    %p215 = scmp.eq.s32.totalorder %s25, 1
    %p216 = por %p214, %p215
    %p217 = scmp.ne.s32.totalorder %s208, %s209
    %p218 = scmp.eq.s32.totalorder %s25, 0
    %p219 = por %p217, %p218
    %p220 = scmp.ne.s32.totalorder %s208, %s209
    %p221 = scmp.eq.s32.totalorder %s26, 1
    %p222 = por %p220, %p221
    %p224 = scmp.ne.s32.totalorder %s209, %s223
    %p225 = scmp.eq.s32.totalorder %s26, 0
    %p226 = por %p224, %p225
    %s228 = sadd.s32 %s227, 1
    %p231 = scmp.eq.s32.totalorder %s20, 1
    %p232 = scmp.ne.s32.totalorder %s227, %s229
    %p233 = scmp.eq.s32.totalorder %s20, 0
    %p234 = por %p232, %p233
    %p235 = scmp.ne.s32.totalorder %s227, %s229
    %p236 = scmp.eq.s32.totalorder %s25, 1
    %p237 = por %p235, %p236
    %p238 = scmp.ne.s32.totalorder %s229, %s230
    %p239 = scmp.eq.s32.totalorder %s25, 0
    %p240 = por %p238, %p239
    %p241 = scmp.ne.s32.totalorder %s229, %s230
    %p242 = scmp.eq.s32.totalorder %s26, 1
    %p243 = por %p241, %p242
    %p245 = scmp.ne.s32.totalorder %s230, %s244
    %p246 = scmp.eq.s32.totalorder %s26, 0
    %p247 = por %p245, %p246
    %s249 = sadd.s32 %s248, 1
    %p252 = scmp.eq.s32.totalorder %s20, 1
    %p253 = scmp.ne.s32.totalorder %s248, %s250
    %p254 = scmp.eq.s32.totalorder %s20, 0
    %p255 = por %p253, %p254
    %p256 = scmp.ne.s32.totalorder %s248, %s250
    %p257 = scmp.eq.s32.totalorder %s25, 1
    %p258 = por %p256, %p257
    %p259 = scmp.ne.s32.totalorder %s250, %s251
    %p260 = scmp.eq.s32.totalorder %s25, 0
    %p261 = por %p259, %p260
    %p262 = scmp.ne.s32.totalorder %s250, %s251
    %p263 = scmp.eq.s32.totalorder %s26, 1
    %p264 = por %p262, %p263
    %p266 = scmp.ne.s32.totalorder %s251, %s265
    %p267 = scmp.eq.s32.totalorder %s26, 0
    %p268 = por %p266, %p267
    %s270 = sadd.s32 %s269, 1
    %p273 = scmp.eq.s32.totalorder %s20, 1
    %p274 = scmp.ne.s32.totalorder %s269, %s271
    %p275 = scmp.eq.s32.totalorder %s20, 0
    %p276 = por %p274, %p275
    %p277 = scmp.ne.s32.totalorder %s269, %s271
    %p278 = scmp.eq.s32.totalorder %s25, 1
    %p279 = por %p277, %p278
    %p280 = scmp.ne.s32.totalorder %s271, %s272
    %p281 = scmp.eq.s32.totalorder %s25, 0
    %p282 = por %p280, %p281
    %p283 = scmp.ne.s32.totalorder %s271, %s272
    %p284 = scmp.eq.s32.totalorder %s26, 1
    %p285 = por %p283, %p284
    %p287 = scmp.ne.s32.totalorder %s272, %s286
    %p288 = scmp.eq.s32.totalorder %s26, 0
    %p289 = por %p287, %p288
    %s291 = sadd.s32 %s290, 1
    %p294 = scmp.eq.s32.totalorder %s20, 1
    %p295 = scmp.ne.s32.totalorder %s290, %s292
    %p296 = scmp.eq.s32.totalorder %s20, 0
    %p297 = por %p295, %p296
    %p298 = scmp.ne.s32.totalorder %s290, %s292
    %p299 = scmp.eq.s32.totalorder %s25, 1
    %p300 = por %p298, %p299
    %p301 = scmp.ne.s32.totalorder %s292, %s293
    %p302 = scmp.eq.s32.totalorder %s25, 0
    %p303 = por %p301, %p302
    %p304 = scmp.ne.s32.totalorder %s292, %s293
    %p305 = scmp.eq.s32.totalorder %s26, 1
    %p306 = por %p304, %p305
    %p308 = scmp.ne.s32.totalorder %s293, %s307
    %p309 = scmp.eq.s32.totalorder %s26, 0
    %p310 = por %p308, %p309
    %s312 = sadd.s32 %s311, 1
    %p315 = scmp.eq.s32.totalorder %s20, 1
    %p316 = scmp.ne.s32.totalorder %s311, %s313
    %p317 = scmp.eq.s32.totalorder %s20, 0
    %p318 = por %p316, %p317
    %p319 = scmp.ne.s32.totalorder %s311, %s313
    %p320 = scmp.eq.s32.totalorder %s25, 1
    %p321 = por %p319, %p320
    %p322 = scmp.ne.s32.totalorder %s313, %s314
    %p323 = scmp.eq.s32.totalorder %s25, 0
    %p324 = por %p322, %p323
    %p325 = scmp.ne.s32.totalorder %s313, %s314
    %p326 = scmp.eq.s32.totalorder %s26, 1
    %p327 = por %p325, %p326
    %p329 = scmp.ne.s32.totalorder %s314, %s328
    %p330 = scmp.eq.s32.totalorder %s26, 0
    %p331 = por %p329, %p330
    %s332 = ssub.s32 %s20, %s27
    %p333 = scmp.eq.s32.totalorder %s332, 0
    %s335 = sadd.s32 %s334, 1
    %s336 = scalar_select %p333, %s334, %s335
    %p339 = pneg %p333
    %p340 = scmp.eq.s32.totalorder %s20, 1
    %p341 = por %p339, %p340
    %p342 = scmp.ne.s32.totalorder %s334, %s337
    %p343 = scmp.eq.s32.totalorder %s20, 0
    %p344 = por %p342, %p343
    %p345 = scmp.ne.s32.totalorder %s334, %s337
    %p346 = scmp.eq.s32.totalorder %s25, 1
    %p347 = por %p345, %p346
    %p348 = scmp.ne.s32.totalorder %s337, %s338
    %p349 = scmp.eq.s32.totalorder %s25, 0
    %p350 = por %p348, %p349
    %p351 = scmp.ne.s32.totalorder %s337, %s338
    %p352 = scmp.eq.s32.totalorder %s26, 1
    %p353 = por %p351, %p352
    %p355 = scmp.ne.s32.totalorder %s338, %s354
    %p356 = scmp.eq.s32.totalorder %s26, 0
    %p357 = por %p355, %p356
    %p358 = scmp.le.s32.totalorder 1, %s20
    %p359 = scmp.lt.s32.totalorder %s20, 3
    %p360 = pnand %p358, %p359
    %p361 = pneg %p360
    // Predicated region
    $region9: #{_lambda_.5} parent=5 // pred_check
      _
    $region10: #{_lambda_.5} parent=5 // pred_check_branch
      %363 = sbr.rel (%p360) target = $region12
    $region11: #{_lambda_.5} parent=5 // pred_region
      %s364 = ssub.s32 %s20, 1
      // Predicated region
      $region13: #{_lambda_.5} parent=11 // pred_check
        %p365 = pneg %p93
      $region14: #{_lambda_.5} parent=11 // pred_check_branch
        %367 = sbr.rel (%p365) target = $region16
      $region15: #{_lambda_.5} parent=11 // pred_region
        _
      $region16: #{_lambda_.5} parent=11 // pred_fallthru
        _
      // Predicated region
      $region17: #{_lambda_.5} parent=11 // pred_check
        %p368 = pneg %p114
      $region18: #{_lambda_.5} parent=11 // pred_check_branch
        %370 = sbr.rel (%p368) target = $region20
      $region19: #{_lambda_.5} parent=11 // pred_region
        _
      $region20: #{_lambda_.5} parent=11 // pred_fallthru
        _
      // Predicated region
      $region21: #{_lambda_.5} parent=11 // pred_check
        %p371 = pneg %p135
      $region22: #{_lambda_.5} parent=11 // pred_check_branch
        %373 = sbr.rel (%p371) target = $region24
      $region23: #{_lambda_.5} parent=11 // pred_region
        _
      $region24: #{_lambda_.5} parent=11 // pred_fallthru
        _
      // Predicated region
      $region25: #{_lambda_.5} parent=11 // pred_check
        %p374 = pneg %p156
      $region26: #{_lambda_.5} parent=11 // pred_check_branch
        %376 = sbr.rel (%p374) target = $region28
      $region27: #{_lambda_.5} parent=11 // pred_region
        _
      $region28: #{_lambda_.5} parent=11 // pred_fallthru
        _
      // Predicated region
      $region29: #{_lambda_.5} parent=11 // pred_check
        %p377 = pneg %p177
      $region30: #{_lambda_.5} parent=11 // pred_check_branch
        %379 = sbr.rel (%p377) target = $region32
      $region31: #{_lambda_.5} parent=11 // pred_region
        _
      $region32: #{_lambda_.5} parent=11 // pred_fallthru
        _
      // Predicated region
      $region33: #{_lambda_.5} parent=11 // pred_check
        %p380 = pneg %p198
      $region34: #{_lambda_.5} parent=11 // pred_check_branch
        %382 = sbr.rel (%p380) target = $region36
      $region35: #{_lambda_.5} parent=11 // pred_region
        _
      $region36: #{_lambda_.5} parent=11 // pred_fallthru
        _
      // Predicated region
      $region37: #{_lambda_.5} parent=11 // pred_check
        %p383 = pneg %p219
      $region38: #{_lambda_.5} parent=11 // pred_check_branch
        %385 = sbr.rel (%p383) target = $region40
      $region39: #{_lambda_.5} parent=11 // pred_region
        _
      $region40: #{_lambda_.5} parent=11 // pred_fallthru
        _
      // Predicated region
      $region41: #{_lambda_.5} parent=11 // pred_check
        %p386 = pneg %p240
      $region42: #{_lambda_.5} parent=11 // pred_check_branch
        %388 = sbr.rel (%p386) target = $region44
      $region43: #{_lambda_.5} parent=11 // pred_region
        _
      $region44: #{_lambda_.5} parent=11 // pred_fallthru
        _
      // Predicated region
      $region45: #{_lambda_.5} parent=11 // pred_check
        %p389 = pneg %p261
      $region46: #{_lambda_.5} parent=11 // pred_check_branch
        %391 = sbr.rel (%p389) target = $region48
      $region47: #{_lambda_.5} parent=11 // pred_region
        _
      $region48: #{_lambda_.5} parent=11 // pred_fallthru
        _
      // Predicated region
      $region49: #{_lambda_.5} parent=11 // pred_check
        %p392 = pneg %p282
      $region50: #{_lambda_.5} parent=11 // pred_check_branch
        %394 = sbr.rel (%p392) target = $region52
      $region51: #{_lambda_.5} parent=11 // pred_region
        _
      $region52: #{_lambda_.5} parent=11 // pred_fallthru
        _
      // Predicated region
      $region53: #{_lambda_.5} parent=11 // pred_check
        %p395 = pneg %p303
      $region54: #{_lambda_.5} parent=11 // pred_check_branch
        %397 = sbr.rel (%p395) target = $region56
      $region55: #{_lambda_.5} parent=11 // pred_region
        _
      $region56: #{_lambda_.5} parent=11 // pred_fallthru
        _
      // Predicated region
      $region57: #{_lambda_.5} parent=11 // pred_check
        %p398 = pneg %p324
      $region58: #{_lambda_.5} parent=11 // pred_check_branch
        %400 = sbr.rel (%p398) target = $region60
      $region59: #{_lambda_.5} parent=11 // pred_region
        _
      $region60: #{_lambda_.5} parent=11 // pred_fallthru
        _
    $region12: #{_lambda_.5} parent=5 // pred_fallthru
      _
    %p401 = scmp.lt.s32.totalorder %s20, 2
    // Predicated region
    $region61: #{_lambda_.5} parent=5 // pred_check
      %p402 = pneg %p401
    $region62: #{_lambda_.5} parent=5 // pred_check_branch
      %404 = sbr.rel (%p402) target = $region64
    $region63: #{_lambda_.5} parent=5 // pred_region
      // Predicated region
      $region65: #{_lambda_.5} parent=63 // pred_check
        %p405 = pneg %p40
      $region66: #{_lambda_.5} parent=63 // pred_check_branch
        %407 = sbr.rel (%p405) target = $region68
      $region67: #{_lambda_.5} parent=63 // pred_region
        %p408 = scmp.lt.s32.totalorder %s20, 1
        %s409 = scalar_select %p408, %s20, 1
        %s410 = smul.addr %s409, 8
        %s411 = scalar_lea.vmem %s0, %s410
      $region68: #{_lambda_.5} parent=63 // pred_fallthru
        _
      // Predicated region
      $region69: #{_lambda_.5} parent=63 // pred_check
        %p412 = pneg %p66
      $region70: #{_lambda_.5} parent=63 // pred_check_branch
        %414 = sbr.rel (%p412) target = $region72
      $region71: #{_lambda_.5} parent=63 // pred_region
        %p415 = scmp.lt.s32.totalorder %s20, 1
        %s416 = scalar_select %p415, %s20, 1
        %s417 = scalar_lea.vmem %s1, %s416
      $region72: #{_lambda_.5} parent=63 // pred_fallthru
        _
    $region64: #{_lambda_.5} parent=5 // pred_fallthru
      _
    %p418 = scmp.le.s32.totalorder 1, %s20
    %p419 = scmp.lt.s32.totalorder %s20, 3
    %p420 = pnand %p418, %p419
    %p421 = pneg %p420
    // Predicated region
    $region73: #{_lambda_.5} parent=5 // pred_check
      _
    $region74: #{_lambda_.5} parent=5 // pred_check_branch
      %423 = sbr.rel (%p420) target = $region76
    $region75: #{_lambda_.5} parent=5 // pred_region
      %s424 = ssub.s32 %s20, 1
      %p425 = scmp.lt.s32.totalorder %s25, 1
      %s426 = scalar_select %p425, %s25, 1
      %s427 = smul.addr %s426, 8
      %s428 = scalar_lea.vmem %s0, %s427
      %p429 = pneg %p46
      %p430 = pneg %p43
      %p431 = scmp.lt.s32.totalorder %s25, 1
      %s432 = scalar_select %p431, %s25, 1
      %s433 = scalar_lea.vmem %s1, %s432
      %p434 = pneg %p72
      %p435 = pneg %p69
      %p436 = pneg %p93
      %p437 = pneg %p90
      %p438 = pneg %p114
      %p439 = pneg %p111
      %p440 = pneg %p135
      %p441 = pneg %p132
      %p442 = pneg %p156
      %p443 = pneg %p153
      %p444 = pneg %p177
      %p445 = pneg %p174
      %p446 = pneg %p198
      %p447 = pneg %p195
      %p448 = pneg %p219
      %p449 = pneg %p216
      %p450 = pneg %p240
      %p451 = pneg %p237
      %p452 = pneg %p261
      %p453 = pneg %p258
      %p454 = pneg %p282
      %p455 = pneg %p279
      %p456 = pneg %p303
      %p457 = pneg %p300
      %p458 = pneg %p324
      %p459 = pneg %p321
      %p460 = pneg %p350
      %p461 = pneg %p347
      %p462 = scmp.lt.s32.totalorder %s25, 1
      %s463 = scalar_select %p462, %s25, 1
      %s464 = smul.addr %s463, 8
      %s465 = scalar_lea.vmem %s14, %s464
      %p466 = scmp.lt.s32.totalorder %s25, 1
      %s467 = scalar_select %p466, %s25, 1
      %s468 = smul.addr %s467, 8
      %s469 = scalar_lea.vmem %s0, %s468
      %p470 = scmp.lt.s32.totalorder %s25, 1
      %s471 = scalar_select %p470, %s25, 1
      %s472 = scalar_lea.vmem %s1, %s471
      %p473 = scmp.lt.s32.totalorder %s25, 1
      %s474 = scalar_select %p473, %s25, 1
      %s475 = smul.addr %s474, 8
      %s476 = scalar_lea.vmem %s14, %s475
      %v478 = vld [vmem:[%s469] sm:$0xff]
      %v479 = vld [vmem:[%s472] sm:$0x1]
      %v480 = vpack.c.bf16 %v478, %v478
      %v481 = vld [vmem:[%s2] sm:$0xf]
      %v482 = vld [vmem:[%s2 + $0x4] sm:$0xf]
      %v483 = vld [vmem:[%s2 + $0x8] sm:$0xf]
      %v484 = vld [vmem:[%s2 + $0xc] sm:$0xf]
      %v485 = vld [vmem:[%s3] sm:$0x1]
      %v487 = vlaneseq
      %v488 = vshrl.u32 %v487, 7
      %v489 = vsub.s32 0, %v488
      %v490 = vrot.slane %v485, %v489
      %v496 = vunpack.c.l.b16 %v481
      %v497 = vunpack.c.l.b16 %v482
      %v498 = vunpack.c.l.b16 %v483
      %v499 = vunpack.c.l.b16 %v484
      %v500 = vpack.c.b16 %v497, %v496
      %v501 = vpack.c.b16 %v499, %v498
      %vm504 = vcmask 261120
      %v506 = vsel %vm504, %v480, 0
      %508 = vmatprep.subr.bf16.mxu0 0
      %509 = vmatpush1.bf16.msra.mxu0 %v500
      %510 = vmatprep.subr.bf16.mxu0 0
      %511 = vmatpush1.bf16.msra.mxu0 %v501
      %512 = vmatprep.subr.bf16.mxu0 0
      %513 = vmatpush1.bf16.msra.mxu0 0
      %514 = vmatprep.subr.bf16.mxu0 0
      %515 = vmatpush1.bf16.msra.mxu0 0
      %516 = vmatprep.subr.bf16.mxu0 0
      %517 = vmatpush1.bf16.msra.mxu0 0
      %518 = vmatprep.subr.bf16.mxu0 0
      %519 = vmatpush1.bf16.msra.mxu0 0
      %520 = vmatprep.subr.bf16.mxu0 0
      %521 = vmatpush1.bf16.msra.mxu0 0
      %522 = vmatprep.subr.bf16.mxu0 0
      %523 = vmatpush1.bf16.msra.mxu0 0
      %524 = vmatprep.subr.bf16.mxu0 0
      %525 = vmatpush1.bf16.msra.mxu0 0
      %526 = vmatprep.subr.bf16.mxu0 0
      %527 = vmatpush1.bf16.msra.mxu0 0
      %528 = vmatprep.subr.bf16.mxu0 0
      %529 = vmatpush1.bf16.msra.mxu0 0
      %530 = vmatprep.subr.bf16.mxu0 0
      %531 = vmatpush1.bf16.msra.mxu0 0
      %532 = vmatprep.subr.bf16.mxu0 0
      %533 = vmatpush1.bf16.msra.mxu0 0
      %534 = vmatprep.subr.bf16.mxu0 0
      %535 = vmatpush1.bf16.msra.mxu0 0
      %536 = vmatprep.subr.bf16.mxu0 0
      %537 = vmatpush1.bf16.msra.mxu0 0
      %538 = vmatprep.subr.bf16.mxu0 0
      %539 = vmatpush1.bf16.msra.mxu0 0
      %540 = vmatprep.mubr.bf16.mxu0 0
      %541 = vmatmul.mubr.bf16.gmra.mrb[0].mxu0 %v506
      %v542 = vpop.f32.mrb[0].mxu0
      %v543 = vadd.f32 %v490, %v542
      %v544 = vpop.f32.mrb[0].mxu0
      %v545 = vpop.f32.mrb[0].mxu0
      %v546 = vpop.f32.mrb[0].mxu0
      %547 = vdwg.mxu0
      %549 = vrot.lane.b32.xlu0 %v543, 96
      %v550 = vpop.permute.xlu0 %549
      %vm551 = vcmask 130048
      %v552 = vsel %vm551, %v543, 0
      %v554 = vsel %vm551, %v550, 0
      %556 = vmatprep.subr.mxu0 0.0
      %557 = vmatpush1.xpose.msra.mxu0 %v554
      %558 = vmatprep.subr.mxu0 0.0
      %559 = vmatpush1.xpose.msra.mxu0 0.0
      %560 = vmatprep.subr.mxu0 0.0
      %561 = vmatpush1.xpose.msra.mxu0 0.0
      %562 = vmatprep.subr.mxu0 0.0
      %563 = vmatpush1.xpose.msra.mxu0 0.0
      %564 = vmatprep.subr.mxu0 0.0
      %565 = vmatpush1.xpose.msra.mxu0 0.0
      %566 = vmatprep.subr.mxu0 0.0
      %567 = vmatpush1.xpose.msra.mxu0 0.0
      %568 = vmatprep.subr.mxu0 0.0
      %569 = vmatpush1.xpose.msra.mxu0 0.0
      %570 = vmatprep.subr.mxu0 0.0
      %571 = vmatpush1.xpose.msra.mxu0 0.0
      %572 = vmatprep.subr.mxu0 0.0
      %573 = vmatpush1.xpose.msra.mxu0 0.0
      %574 = vmatprep.subr.mxu0 0.0
      %575 = vmatpush1.xpose.msra.mxu0 0.0
      %576 = vmatprep.subr.mxu0 0.0
      %577 = vmatpush1.xpose.msra.mxu0 0.0
      %578 = vmatprep.subr.mxu0 0.0
      %579 = vmatpush1.xpose.msra.mxu0 0.0
      %580 = vmatprep.subr.mxu0 0.0
      %581 = vmatpush1.xpose.msra.mxu0 0.0
      %582 = vmatprep.subr.mxu0 0.0
      %583 = vmatpush1.xpose.msra.mxu0 0.0
      %584 = vmatprep.subr.mxu0 0.0
      %585 = vmatpush1.xpose.msra.mxu0 0.0
      %586 = vmatprep.subr.mxu0 0.0
      %587 = vmatpush1.xpose.msra.mxu0 0.0
      %588 = vmatprep.subr.mxu0 0.0
      %589 = vmatpush1.xpose.msra.mxu0 0.0
      %590 = vmatprep.subr.mxu0 0.0
      %591 = vmatpush1.xpose.msra.mxu0 0.0
      %592 = vmatprep.subr.mxu0 0.0
      %593 = vmatpush1.xpose.msra.mxu0 0.0
      %594 = vmatprep.subr.mxu0 0.0
      %595 = vmatpush1.xpose.msra.mxu0 0.0
      %596 = vmatprep.subr.mxu0 0.0
      %597 = vmatpush1.xpose.msra.mxu0 0.0
      %598 = vmatprep.subr.mxu0 0.0
      %599 = vmatpush1.xpose.msra.mxu0 0.0
      %600 = vmatprep.subr.mxu0 0.0
      %601 = vmatpush1.xpose.msra.mxu0 0.0
      %602 = vmatprep.subr.mxu0 0.0
      %603 = vmatpush1.xpose.msra.mxu0 0.0
      %604 = vmatprep.subr.mxu0 0.0
      %605 = vmatpush1.xpose.msra.mxu0 0.0
      %606 = vmatprep.subr.mxu0 0.0
      %607 = vmatpush1.xpose.msra.mxu0 0.0
      %608 = vmatprep.subr.mxu0 0.0
      %609 = vmatpush1.xpose.msra.mxu0 0.0
      %610 = vmatprep.subr.mxu0 0.0
      %611 = vmatpush1.xpose.msra.mxu0 0.0
      %612 = vmatprep.subr.mxu0 0.0
      %613 = vmatpush1.xpose.msra.mxu0 0.0
      %614 = vmatprep.subr.mxu0 0.0
      %615 = vmatpush1.xpose.msra.mxu0 0.0
      %616 = vmatprep.subr.mxu0 0.0
      %617 = vmatpush1.xpose.msra.mxu0 0.0
      %618 = vmatprep.subr.mxu0 0.0
      %619 = vmatpush1.xpose.msra.mxu0 0.0
      %620 = vmatprep.mubr.f32.mxu0 0.0
      %621 = vmatmul.mubr.f32.gmra.mrb[0].mxu0 %v552
      %v622 = vpop.f32.mrb[0].mxu0
      %v623 = vadd.f32 0.0, %v622
      %v624 = vpop.f32.mrb[0].mxu0
      %625 = vdwg.mxu0
      %v626 = vmul.f32 %v623, 0.25
      %vm627 = vcmp.gt.f32.partialorder %v479, 0.0
      %v628 = vsel %vm627, 1, 0
      %v629 = vlaneseq
      %v630 = vshrl.u32 %v629, 7
      %v631 = vsub.s32 0, %v630
      %v632 = vrot.slane %v628, %v631
      %vm633 = vcmp.eq.s32.totalorder %v632, 1
      %v634 = vsel %vm633, %v626, -1e+30
      %vm635 = vcmask 64512
      %v636 = vsel %vm635, %v634, -inf
      %637 = vmax.xlane.f32.xlu0 %v636
      %v638 = vpop.xlane.xlu0 %637
      %v639 = vsub.f32 %v634, %v638
      %v640 = vmul.f32 %v639, 1.442695
      %v641 = vpow.pop %v640
      %v642 = vsel %vm635, %v641, 0.0
      %643 = vadd.xlane.f32.xlu0 %v642
      %v644 = vpop.xlane.xlu0 %643
      %v645 = vrcp.pop %v644
      %v646 = vmul.f32 %v641, %v645
      %647 = vrot.lane.b32.xlu0 %v543, 64
      %v648 = vpop.permute.xlu0 %647
      %v651 = vsel %vm635, %v646, 0
      %653 = vmatprep.subr.mxu0 0.0
      %654 = vmatpush1.msra.mxu0 %v648
      %655 = vmatprep.subr.mxu0 0.0
      %656 = vmatpush1.msra.mxu0 0.0
      %657 = vmatprep.subr.mxu0 0.0
      %658 = vmatpush1.msra.mxu0 0.0
      %659 = vmatprep.subr.mxu0 0.0
      %660 = vmatpush1.msra.mxu0 0.0
      %661 = vmatprep.subr.mxu0 0.0
      %662 = vmatpush1.msra.mxu0 0.0
      %663 = vmatprep.subr.mxu0 0.0
      %664 = vmatpush1.msra.mxu0 0.0
      %665 = vmatprep.subr.mxu0 0.0
      %666 = vmatpush1.msra.mxu0 0.0
      %667 = vmatprep.subr.mxu0 0.0
      %668 = vmatpush1.msra.mxu0 0.0
      %669 = vmatprep.subr.mxu0 0.0
      %670 = vmatpush1.msra.mxu0 0.0
      %671 = vmatprep.subr.mxu0 0.0
      %672 = vmatpush1.msra.mxu0 0.0
      %673 = vmatprep.subr.mxu0 0.0
      %674 = vmatpush1.msra.mxu0 0.0
      %675 = vmatprep.subr.mxu0 0.0
      %676 = vmatpush1.msra.mxu0 0.0
      %677 = vmatprep.subr.mxu0 0.0
      %678 = vmatpush1.msra.mxu0 0.0
      %679 = vmatprep.subr.mxu0 0.0
      %680 = vmatpush1.msra.mxu0 0.0
      %681 = vmatprep.subr.mxu0 0.0
      %682 = vmatpush1.msra.mxu0 0.0
      %683 = vmatprep.subr.mxu0 0.0
      %684 = vmatpush1.msra.mxu0 0.0
      %685 = vmatprep.subr.mxu0 0.0
      %686 = vmatpush1.msra.mxu0 0.0
      %687 = vmatprep.subr.mxu0 0.0
      %688 = vmatpush1.msra.mxu0 0.0
      %689 = vmatprep.subr.mxu0 0.0
      %690 = vmatpush1.msra.mxu0 0.0
      %691 = vmatprep.subr.mxu0 0.0
      %692 = vmatpush1.msra.mxu0 0.0
      %693 = vmatprep.subr.mxu0 0.0
      %694 = vmatpush1.msra.mxu0 0.0
      %695 = vmatprep.subr.mxu0 0.0
      %696 = vmatpush1.msra.mxu0 0.0
      %697 = vmatprep.subr.mxu0 0.0
      %698 = vmatpush1.msra.mxu0 0.0
      %699 = vmatprep.subr.mxu0 0.0
      %700 = vmatpush1.msra.mxu0 0.0
      %701 = vmatprep.subr.mxu0 0.0
      %702 = vmatpush1.msra.mxu0 0.0
      %703 = vmatprep.subr.mxu0 0.0
      %704 = vmatpush1.msra.mxu0 0.0
      %705 = vmatprep.subr.mxu0 0.0
      %706 = vmatpush1.msra.mxu0 0.0
      %707 = vmatprep.subr.mxu0 0.0
      %708 = vmatpush1.msra.mxu0 0.0
      %709 = vmatprep.subr.mxu0 0.0
      %710 = vmatpush1.msra.mxu0 0.0
      %711 = vmatprep.subr.mxu0 0.0
      %712 = vmatpush1.msra.mxu0 0.0
      %713 = vmatprep.subr.mxu0 0.0
      %714 = vmatpush1.msra.mxu0 0.0
      %715 = vmatprep.subr.mxu0 0.0
      %716 = vmatpush1.msra.mxu0 0.0
      %717 = vmatprep.mubr.f32.mxu0 0.0
      %718 = vmatmul.mubr.f32.gmra.mrb[0].mxu0 %v651
      %v719 = vpop.f32.mrb[0].mxu0
      %v720 = vadd.f32 0.0, %v719
      %v721 = vpop.f32.mrb[0].mxu0
      %722 = vdwg.mxu0
      %723 = vrot.lane.b32.xlu0 %v543, 112
      %v724 = vpop.permute.xlu0 %723
      %725 = vrot.lane.b32.xlu0 %v543, 80
      %v726 = vpop.permute.xlu0 %725
      %v727 = vsel %vm551, %v724, 0
      %v729 = vsel %vm551, %v726, 0
      %731 = vmatprep.subr.mxu0 0.0
      %732 = vmatpush1.xpose.msra.mxu0 %v729
      %733 = vmatprep.subr.mxu0 0.0
      %734 = vmatpush1.xpose.msra.mxu0 0.0
      %735 = vmatprep.subr.mxu0 0.0
      %736 = vmatpush1.xpose.msra.mxu0 0.0
      %737 = vmatprep.subr.mxu0 0.0
      %738 = vmatpush1.xpose.msra.mxu0 0.0
      %739 = vmatprep.subr.mxu0 0.0
      %740 = vmatpush1.xpose.msra.mxu0 0.0
      %741 = vmatprep.subr.mxu0 0.0
      %742 = vmatpush1.xpose.msra.mxu0 0.0
      %743 = vmatprep.subr.mxu0 0.0
      %744 = vmatpush1.xpose.msra.mxu0 0.0
      %745 = vmatprep.subr.mxu0 0.0
      %746 = vmatpush1.xpose.msra.mxu0 0.0
      %747 = vmatprep.subr.mxu0 0.0
      %748 = vmatpush1.xpose.msra.mxu0 0.0
      %749 = vmatprep.subr.mxu0 0.0
      %750 = vmatpush1.xpose.msra.mxu0 0.0
      %751 = vmatprep.subr.mxu0 0.0
      %752 = vmatpush1.xpose.msra.mxu0 0.0
      %753 = vmatprep.subr.mxu0 0.0
      %754 = vmatpush1.xpose.msra.mxu0 0.0
      %755 = vmatprep.subr.mxu0 0.0
      %756 = vmatpush1.xpose.msra.mxu0 0.0
      %757 = vmatprep.subr.mxu0 0.0
      %758 = vmatpush1.xpose.msra.mxu0 0.0
      %759 = vmatprep.subr.mxu0 0.0
      %760 = vmatpush1.xpose.msra.mxu0 0.0
      %761 = vmatprep.subr.mxu0 0.0
      %762 = vmatpush1.xpose.msra.mxu0 0.0
      %763 = vmatprep.subr.mxu0 0.0
      %764 = vmatpush1.xpose.msra.mxu0 0.0
      %765 = vmatprep.subr.mxu0 0.0
      %766 = vmatpush1.xpose.msra.mxu0 0.0
      %767 = vmatprep.subr.mxu0 0.0
      %768 = vmatpush1.xpose.msra.mxu0 0.0
      %769 = vmatprep.subr.mxu0 0.0
      %770 = vmatpush1.xpose.msra.mxu0 0.0
      %771 = vmatprep.subr.mxu0 0.0
      %772 = vmatpush1.xpose.msra.mxu0 0.0
      %773 = vmatprep.subr.mxu0 0.0
      %774 = vmatpush1.xpose.msra.mxu0 0.0
      %775 = vmatprep.subr.mxu0 0.0
      %776 = vmatpush1.xpose.msra.mxu0 0.0
      %777 = vmatprep.subr.mxu0 0.0
      %778 = vmatpush1.xpose.msra.mxu0 0.0
      %779 = vmatprep.subr.mxu0 0.0
      %780 = vmatpush1.xpose.msra.mxu0 0.0
      %781 = vmatprep.subr.mxu0 0.0
      %782 = vmatpush1.xpose.msra.mxu0 0.0
      %783 = vmatprep.subr.mxu0 0.0
      %784 = vmatpush1.xpose.msra.mxu0 0.0
      %785 = vmatprep.subr.mxu0 0.0
      %786 = vmatpush1.xpose.msra.mxu0 0.0
      %787 = vmatprep.subr.mxu0 0.0
      %788 = vmatpush1.xpose.msra.mxu0 0.0
      %789 = vmatprep.subr.mxu0 0.0
      %790 = vmatpush1.xpose.msra.mxu0 0.0
      %791 = vmatprep.subr.mxu0 0.0
      %792 = vmatpush1.xpose.msra.mxu0 0.0
      %793 = vmatprep.subr.mxu0 0.0
      %794 = vmatpush1.xpose.msra.mxu0 0.0
      %795 = vmatprep.mubr.f32.mxu0 0.0
      %796 = vmatmul.mubr.f32.gmra.mrb[0].mxu0 %v727
      %v797 = vpop.f32.mrb[0].mxu0
      %v798 = vadd.f32 0.0, %v797
      %v799 = vpop.f32.mrb[0].mxu0
      %800 = vdwg.mxu0
      %v801 = vmul.f32 %v798, 0.25
      %v802 = vsel %vm633, %v801, -1e+30
      %v803 = vsel %vm635, %v802, -inf
      %804 = vmax.xlane.f32.xlu0 %v803
      %v805 = vpop.xlane.xlu0 %804
      %v806 = vsub.f32 %v802, %v805
      %v807 = vmul.f32 %v806, 1.442695
      %v808 = vpow.pop %v807
      %v809 = vsel %vm635, %v808, 0.0
      %810 = vadd.xlane.f32.xlu0 %v809
      %v811 = vpop.xlane.xlu0 %810
      %v812 = vrcp.pop %v811
      %v813 = vmul.f32 %v808, %v812
      %814 = vrot.lane.b32.xlu0 %v543, 48
      %v815 = vpop.permute.xlu0 %814
      %v818 = vsel %vm635, %v813, 0
      %820 = vmatprep.subr.mxu0 0.0
      %821 = vmatpush1.msra.mxu0 %v815
      %822 = vmatprep.subr.mxu0 0.0
      %823 = vmatpush1.msra.mxu0 0.0
      %824 = vmatprep.subr.mxu0 0.0
      %825 = vmatpush1.msra.mxu0 0.0
      %826 = vmatprep.subr.mxu0 0.0
      %827 = vmatpush1.msra.mxu0 0.0
      %828 = vmatprep.subr.mxu0 0.0
      %829 = vmatpush1.msra.mxu0 0.0
      %830 = vmatprep.subr.mxu0 0.0
      %831 = vmatpush1.msra.mxu0 0.0
      %832 = vmatprep.subr.mxu0 0.0
      %833 = vmatpush1.msra.mxu0 0.0
      %834 = vmatprep.subr.mxu0 0.0
      %835 = vmatpush1.msra.mxu0 0.0
      %836 = vmatprep.subr.mxu0 0.0
      %837 = vmatpush1.msra.mxu0 0.0
      %838 = vmatprep.subr.mxu0 0.0
      %839 = vmatpush1.msra.mxu0 0.0
      %840 = vmatprep.subr.mxu0 0.0
      %841 = vmatpush1.msra.mxu0 0.0
      %842 = vmatprep.subr.mxu0 0.0
      %843 = vmatpush1.msra.mxu0 0.0
      %844 = vmatprep.subr.mxu0 0.0
      %845 = vmatpush1.msra.mxu0 0.0
      %846 = vmatprep.subr.mxu0 0.0
      %847 = vmatpush1.msra.mxu0 0.0
      %848 = vmatprep.subr.mxu0 0.0
      %849 = vmatpush1.msra.mxu0 0.0
      %850 = vmatprep.subr.mxu0 0.0
      %851 = vmatpush1.msra.mxu0 0.0
      %852 = vmatprep.subr.mxu0 0.0
      %853 = vmatpush1.msra.mxu0 0.0
      %854 = vmatprep.subr.mxu0 0.0
      %855 = vmatpush1.msra.mxu0 0.0
      %856 = vmatprep.subr.mxu0 0.0
      %857 = vmatpush1.msra.mxu0 0.0
      %858 = vmatprep.subr.mxu0 0.0
      %859 = vmatpush1.msra.mxu0 0.0
      %860 = vmatprep.subr.mxu0 0.0
      %861 = vmatpush1.msra.mxu0 0.0
      %862 = vmatprep.subr.mxu0 0.0
      %863 = vmatpush1.msra.mxu0 0.0
      %864 = vmatprep.subr.mxu0 0.0
      %865 = vmatpush1.msra.mxu0 0.0
      %866 = vmatprep.subr.mxu0 0.0
      %867 = vmatpush1.msra.mxu0 0.0
      %868 = vmatprep.subr.mxu0 0.0
      %869 = vmatpush1.msra.mxu0 0.0
      %870 = vmatprep.subr.mxu0 0.0
      %871 = vmatpush1.msra.mxu0 0.0
      %872 = vmatprep.subr.mxu0 0.0
      %873 = vmatpush1.msra.mxu0 0.0
      %874 = vmatprep.subr.mxu0 0.0
      %875 = vmatpush1.msra.mxu0 0.0
      %876 = vmatprep.subr.mxu0 0.0
      %877 = vmatpush1.msra.mxu0 0.0
      %878 = vmatprep.subr.mxu0 0.0
      %879 = vmatpush1.msra.mxu0 0.0
      %880 = vmatprep.subr.mxu0 0.0
      %881 = vmatpush1.msra.mxu0 0.0
      %882 = vmatprep.subr.mxu0 0.0
      %883 = vmatpush1.msra.mxu0 0.0
      %884 = vmatprep.mubr.f32.mxu0 0.0
      %885 = vmatmul.mubr.f32.gmra.mrb[0].mxu0 %v818
      %v886 = vpop.f32.mrb[0].mxu0
      %v887 = vadd.f32 0.0, %v886
      %v888 = vpop.f32.mrb[0].mxu0
      %889 = vdwg.mxu0
      %891 = vrot.lane.b32.xlu0 %v887, 16
      %v892 = vpop.permute.xlu0 %891
      %v894 = vsel %vm551, %v720, %v892
      %v895 = vpack.c.bf16 %v894, %v894
      %v896 = vld [vmem:[%s4] sm:$0xf]
      %v897 = vld [vmem:[%s4 + $0x4] sm:$0xf]
      %v898 = vld [vmem:[%s4 + $0x8] sm:$0xf]
      %v899 = vld [vmem:[%s4 + $0xc] sm:$0xf]
      %v900 = vld [vmem:[%s5] sm:$0x1]
      %v902 = vlaneseq
      %v903 = vshrl.u32 %v902, 7
      %v904 = vsub.s32 0, %v903
      %v905 = vrot.slane %v900, %v904
      %v911 = vunpack.c.l.b16 %v896
      %v912 = vunpack.c.l.b16 %v897
      %v913 = vunpack.c.l.b16 %v898
      %v914 = vunpack.c.l.b16 %v899
      %v915 = vpack.c.b16 %v912, %v911
      %v916 = vpack.c.b16 %v914, %v913
      %v920 = vsel %vm504, %v895, 0
      %922 = vmatprep.subr.bf16.mxu0 0
      %923 = vmatpush1.bf16.msra.mxu0 %v915
      %924 = vmatprep.subr.bf16.mxu0 0
      %925 = vmatpush1.bf16.msra.mxu0 %v916
      %926 = vmatprep.subr.bf16.mxu0 0
      %927 = vmatpush1.bf16.msra.mxu0 0
      %928 = vmatprep.subr.bf16.mxu0 0
      %929 = vmatpush1.bf16.msra.mxu0 0
      %930 = vmatprep.subr.bf16.mxu0 0
      %931 = vmatpush1.bf16.msra.mxu0 0
      %932 = vmatprep.subr.bf16.mxu0 0
      %933 = vmatpush1.bf16.msra.mxu0 0
      %934 = vmatprep.subr.bf16.mxu0 0
      %935 = vmatpush1.bf16.msra.mxu0 0
      %936 = vmatprep.subr.bf16.mxu0 0
      %937 = vmatpush1.bf16.msra.mxu0 0
      %938 = vmatprep.subr.bf16.mxu0 0
      %939 = vmatpush1.bf16.msra.mxu0 0
      %940 = vmatprep.subr.bf16.mxu0 0
      %941 = vmatpush1.bf16.msra.mxu0 0
      %942 = vmatprep.subr.bf16.mxu0 0
      %943 = vmatpush1.bf16.msra.mxu0 0
      %944 = vmatprep.subr.bf16.mxu0 0
      %945 = vmatpush1.bf16.msra.mxu0 0
      %946 = vmatprep.subr.bf16.mxu0 0
      %947 = vmatpush1.bf16.msra.mxu0 0
      %948 = vmatprep.subr.bf16.mxu0 0
      %949 = vmatpush1.bf16.msra.mxu0 0
      %950 = vmatprep.subr.bf16.mxu0 0
      %951 = vmatpush1.bf16.msra.mxu0 0
      %952 = vmatprep.subr.bf16.mxu0 0
      %953 = vmatpush1.bf16.msra.mxu0 0
      %954 = vmatprep.mubr.bf16.mxu0 0
      %955 = vmatmul.mubr.bf16.gmra.mrb[0].mxu0 %v920
      %v956 = vpop.f32.mrb[0].mxu0
      %v957 = vadd.f32 %v905, %v956
      %v958 = vpop.f32.mrb[0].mxu0
      %v959 = vpop.f32.mrb[0].mxu0
      %v960 = vpop.f32.mrb[0].mxu0
      %961 = vdwg.mxu0
      %v962 = vadd.f32 %v478, %v957
      %v963 = vsel %vm504, %v962, 0.0
      %964 = vadd.xlane.f32.xlu0 %v963
      %v965 = vpop.xlane.xlu0 %964
      %v966 = vrcp.pop 32.0
      %v967 = vmul.f32 %v965, %v966
      %v968 = vsub.f32 %v962, %v967
      %v969 = vmul.f32 %v968, %v968
      %v970 = vsel %vm504, %v969, 0.0
      %971 = vadd.xlane.f32.xlu0 %v970
      %v972 = vpop.xlane.xlu0 %971
      %v973 = vmul.f32 %v972, %v966
      %v974 = vadd.f32 %v973, 1e-12
      %v975 = vrsqrt.pop %v974
      %v976 = vmul.f32 %v968, %v975
      %v977 = vld [vmem:[%s6] sm:$0x1]
      %v979 = vlaneseq
      %v980 = vshrl.u32 %v979, 7
      %v981 = vsub.s32 0, %v980
      %v982 = vrot.slane %v977, %v981
      %v984 = vmul.f32 %v976, %v982
      %v985 = vld [vmem:[%s7] sm:$0x1]
      %v987 = vlaneseq
      %v988 = vshrl.u32 %v987, 7
      %v989 = vsub.s32 0, %v988
      %v990 = vrot.slane %v985, %v989
      %v992 = vadd.f32 %v984, %v990
      %v993 = vpack.c.bf16 %v992, %v992
      %v994 = vld [vmem:[%s8] sm:$0xf]
      %v995 = vld [vmem:[%s8 + $0x4] sm:$0xf]
      %v996 = vld [vmem:[%s8 + $0x8] sm:$0xf]
      %v997 = vld [vmem:[%s8 + $0xc] sm:$0xf]
      %v998 = vld [vmem:[%s9] sm:$0x1]
      %v1000 = vlaneseq
      %v1001 = vshrl.u32 %v1000, 7
      %v1002 = vsub.s32 0, %v1001
      %v1003 = vrot.slane %v998, %v1002
      %v1009 = vunpack.c.l.b16 %v994
      %v1010 = vunpack.c.l.b16 %v995
      %v1011 = vunpack.c.l.b16 %v996
      %v1012 = vunpack.c.l.b16 %v997
      %v1013 = vpack.c.b16 %v1010, %v1009
      %v1014 = vpack.c.b16 %v1012, %v1011
      %v1018 = vsel %vm504, %v993, 0
      %1020 = vmatprep.subr.bf16.mxu0 0
      %1021 = vmatpush1.bf16.msra.mxu0 %v1013
      %1022 = vmatprep.subr.bf16.mxu0 0
      %1023 = vmatpush1.bf16.msra.mxu0 %v1014
      %1024 = vmatprep.subr.bf16.mxu0 0
      %1025 = vmatpush1.bf16.msra.mxu0 0
      %1026 = vmatprep.subr.bf16.mxu0 0
      %1027 = vmatpush1.bf16.msra.mxu0 0
      %1028 = vmatprep.subr.bf16.mxu0 0
      %1029 = vmatpush1.bf16.msra.mxu0 0
      %1030 = vmatprep.subr.bf16.mxu0 0
      %1031 = vmatpush1.bf16.msra.mxu0 0
      %1032 = vmatprep.subr.bf16.mxu0 0
      %1033 = vmatpush1.bf16.msra.mxu0 0
      %1034 = vmatprep.subr.bf16.mxu0 0
      %1035 = vmatpush1.bf16.msra.mxu0 0
      %1036 = vmatprep.subr.bf16.mxu0 0
      %1037 = vmatpush1.bf16.msra.mxu0 0
      %1038 = vmatprep.subr.bf16.mxu0 0
      %1039 = vmatpush1.bf16.msra.mxu0 0
      %1040 = vmatprep.subr.bf16.mxu0 0
      %1041 = vmatpush1.bf16.msra.mxu0 0
      %1042 = vmatprep.subr.bf16.mxu0 0
      %1043 = vmatpush1.bf16.msra.mxu0 0
      %1044 = vmatprep.subr.bf16.mxu0 0
      %1045 = vmatpush1.bf16.msra.mxu0 0
      %1046 = vmatprep.subr.bf16.mxu0 0
      %1047 = vmatpush1.bf16.msra.mxu0 0
      %1048 = vmatprep.subr.bf16.mxu0 0
      %1049 = vmatpush1.bf16.msra.mxu0 0
      %1050 = vmatprep.subr.bf16.mxu0 0
      %1051 = vmatpush1.bf16.msra.mxu0 0
      %1052 = vmatprep.mubr.bf16.mxu0 0
      %1053 = vmatmul.mubr.bf16.gmra.mrb[0].mxu0 %v1018
      %v1054 = vpop.f32.mrb[0].mxu0
      %v1055 = vadd.f32 %v1003, %v1054
      %v1056 = vpop.f32.mrb[0].mxu0
      %v1057 = vpop.f32.mrb[0].mxu0
      %v1058 = vpop.f32.mrb[0].mxu0
      %1059 = vdwg.mxu0
      %v1060 = vmul.f32 %v1055, %v1055
      %v1061 = vmul.f32 %v1055, %v1060
      %v1062 = vmul.f32 %v1061, 0.044715
      %v1063 = vadd.f32 %v1055, %v1062
      %v1064 = vmul.f32 %v1063, 0.7978846
      %v1065 = vtanh.pop %v1064
      %v1066 = vadd.f32 %v1065, 1.0
      %v1067 = vmul.f32 %v1066, 0.5
      %v1068 = vmul.f32 %v1055, %v1067
      %v1069 = vpack.c.bf16 %v1068, %v1068
      %v1070 = vld [vmem:[%s10] sm:$0xf]
      %v1071 = vld [vmem:[%s10 + $0x4] sm:$0xf]
      %v1072 = vld [vmem:[%s10 + $0x8] sm:$0xf]
      %v1073 = vld [vmem:[%s10 + $0xc] sm:$0xf]
      %v1074 = vld [vmem:[%s10 + $0x10] sm:$0xf]
      %v1075 = vld [vmem:[%s10 + $0x14] sm:$0xf]
      %v1076 = vld [vmem:[%s10 + $0x18] sm:$0xf]
      %v1077 = vld [vmem:[%s10 + $0x1c] sm:$0xf]
      %v1078 = vld [vmem:[%s11] sm:$0x1]
      %v1080 = vlaneseq
      %v1081 = vshrl.u32 %v1080, 7
      %v1082 = vsub.s32 0, %v1081
      %v1083 = vrot.slane %v1078, %v1082
      %v1093 = vunpack.c.l.b16 %v1070
      %v1094 = vunpack.c.l.b16 %v1071
      %v1095 = vunpack.c.l.b16 %v1072
      %v1096 = vunpack.c.l.b16 %v1073
      %v1097 = vunpack.c.l.b16 %v1074
      %v1098 = vunpack.c.l.b16 %v1075
      %v1099 = vunpack.c.l.b16 %v1076
      %v1100 = vunpack.c.l.b16 %v1077
      %v1101 = vpack.c.b16 %v1094, %v1093
      %v1102 = vpack.c.b16 %v1096, %v1095
      %v1103 = vpack.c.b16 %v1098, %v1097
      %v1104 = vpack.c.b16 %v1100, %v1099
      %vm1109 = vcmask 523264
      %v1111 = vsel %vm1109, %v1069, 0
      %1113 = vmatprep.subr.bf16.mxu0 0
      %1114 = vmatpush1.bf16.msra.mxu0 %v1101
      %1115 = vmatprep.subr.bf16.mxu0 0
      %1116 = vmatpush1.bf16.msra.mxu0 %v1102
      %1117 = vmatprep.subr.bf16.mxu0 0
      %1118 = vmatpush1.bf16.msra.mxu0 %v1103
      %1119 = vmatprep.subr.bf16.mxu0 0
      %1120 = vmatpush1.bf16.msra.mxu0 %v1104
      %1121 = vmatprep.subr.bf16.mxu0 0
      %1122 = vmatpush1.bf16.msra.mxu0 0
      %1123 = vmatprep.subr.bf16.mxu0 0
      %1124 = vmatpush1.bf16.msra.mxu0 0
      %1125 = vmatprep.subr.bf16.mxu0 0
      %1126 = vmatpush1.bf16.msra.mxu0 0
      %1127 = vmatprep.subr.bf16.mxu0 0
      %1128 = vmatpush1.bf16.msra.mxu0 0
      %1129 = vmatprep.subr.bf16.mxu0 0
      %1130 = vmatpush1.bf16.msra.mxu0 0
      %1131 = vmatprep.subr.bf16.mxu0 0
      %1132 = vmatpush1.bf16.msra.mxu0 0
      %1133 = vmatprep.subr.bf16.mxu0 0
      %1134 = vmatpush1.bf16.msra.mxu0 0
      %1135 = vmatprep.subr.bf16.mxu0 0
      %1136 = vmatpush1.bf16.msra.mxu0 0
      %1137 = vmatprep.subr.bf16.mxu0 0
      %1138 = vmatpush1.bf16.msra.mxu0 0
      %1139 = vmatprep.subr.bf16.mxu0 0
      %1140 = vmatpush1.bf16.msra.mxu0 0
      %1141 = vmatprep.subr.bf16.mxu0 0
      %1142 = vmatpush1.bf16.msra.mxu0 0
      %1143 = vmatprep.subr.bf16.mxu0 0
      %1144 = vmatpush1.bf16.msra.mxu0 0
      %1145 = vmatprep.mubr.bf16.mxu0 0
      %1146 = vmatmul.mubr.bf16.gmra.mrb[0].mxu0 %v1111
      %v1147 = vpop.f32.mrb[0].mxu0
      %v1148 = vadd.f32 %v1083, %v1147
      %v1149 = vpop.f32.mrb[0].mxu0
      %v1150 = vpop.f32.mrb[0].mxu0
      %v1151 = vpop.f32.mrb[0].mxu0
      %1152 = vdwg.mxu0
      %v1153 = vadd.f32 %v992, %v1148
      %v1154 = vsel %vm504, %v1153, 0.0
      %1155 = vadd.xlane.f32.xlu0 %v1154
      %v1156 = vpop.xlane.xlu0 %1155
      %v1157 = vmul.f32 %v1156, %v966
      %v1158 = vsub.f32 %v1153, %v1157
      %v1159 = vmul.f32 %v1158, %v1158
      %v1160 = vsel %vm504, %v1159, 0.0
      %1161 = vadd.xlane.f32.xlu0 %v1160
      %v1162 = vpop.xlane.xlu0 %1161
      %v1163 = vmul.f32 %v1162, %v966
      %v1164 = vadd.f32 %v1163, 1e-12
      %v1165 = vrsqrt.pop %v1164
      %v1166 = vmul.f32 %v1158, %v1165
      %v1167 = vld [vmem:[%s12] sm:$0x1]
      %v1169 = vlaneseq
      %v1170 = vshrl.u32 %v1169, 7
      %v1171 = vsub.s32 0, %v1170
      %v1172 = vrot.slane %v1167, %v1171
      %v1174 = vmul.f32 %v1166, %v1172
      %v1175 = vld [vmem:[%s13] sm:$0x1]
      %v1177 = vlaneseq
      %v1178 = vshrl.u32 %v1177, 7
      %v1179 = vsub.s32 0, %v1178
      %v1180 = vrot.slane %v1175, %v1179
      %v1182 = vadd.f32 %v1174, %v1180
      %1183 = vst.msk [vmem:[%s476] sm:$0xff] %vm504, %v1182
      %p1184 = scmp.lt.s32.totalorder %s25, 1
      %s1185 = scalar_select %p1184, %s25, 1
      %s1186 = smul.addr %s1185, 8
      %s1187 = scalar_lea.vmem %s14, %s1186
      // Predicated region
      $region77: #{_lambda_.5} parent=75 // pred_check
        %p1188 = pneg %p347
      $region78: #{_lambda_.5} parent=75 // pred_check_branch
        %1190 = sbr.rel (%p1188) target = $region80
      $region79: #{_lambda_.5} parent=75 // pred_region
        _
      $region80: #{_lambda_.5} parent=75 // pred_fallthru
        _
    $region76: #{_lambda_.5} parent=5 // pred_fallthru
      _
    %p1191 = scmp.le.s32.totalorder 2, %s20
    // Predicated region
    $region81: #{_lambda_.5} parent=5 // pred_check
      %p1192 = pneg %p1191
    $region82: #{_lambda_.5} parent=5 // pred_check_branch
      %1194 = sbr.rel (%p1192) target = $region84
    $region83: #{_lambda_.5} parent=5 // pred_region
      %s1195 = ssub.s32 %s20, 2
      // Predicated region
      $region85: #{_lambda_.5} parent=83 // pred_check
        %p1196 = pneg %p353
      $region86: #{_lambda_.5} parent=83 // pred_check_branch
        %1198 = sbr.rel (%p1196) target = $region88
      $region87: #{_lambda_.5} parent=83 // pred_region
        %p1199 = scmp.lt.s32.totalorder %s26, 1
        %s1200 = scalar_select %p1199, %s26, 1
        %s1201 = smul.addr %s1200, 8
        %s1202 = scalar_lea.vmem %s14, %s1201
      $region88: #{_lambda_.5} parent=83 // pred_fallthru
        _
    $region84: #{_lambda_.5} parent=5 // pred_fallthru
      _
  $region6: #{_lambda_.5} parent=0 // loop_footer
    %s24 = sadd.s32 1, %s20
  $region7: #{_lambda_.5} parent=0 // loop_footer_branch
    %19 = sbr.rel target = $region3
  $region8: #{_lambda_.5} parent=0 // loop_exit
    _

</llo_original>
